<compile_context>
chip_gen: v7x
topology: tpu7x:2x2x1
jax: 0.10.0
libtpu: 0.0.40
codegen_flags: <defaults>
</compile_context>

<pallas_src>
import functools

import jax
import jax.numpy as jnp
from jax import lax
from jax.experimental import pallas as pl
from jax.experimental.pallas import tpu as pltpu


def _gibbs_kernel(x_ref, w1t_ref, b1_ref, w2_ref, u_ref, out_ref, *,
                  n_choices, discrete_dim, num_rounds):
    D = discrete_dim
    H = w1t_ref.shape[0]
    N = x_ref.shape[1]

    # Hoist the (tiny) weights out of all loops: read once, keep in vregs.
    w1t = w1t_ref[...]                      # (H, D)  == W1^T
    b1 = b1_ref[...]                        # (H, 1)
    w2 = w2_ref[...]                        # (H, 1)

    cur0 = x_ref[...]                       # (D, N), chains on the lane axis
    # One matmul at kernel entry; afterwards the pre-activation is maintained
    # incrementally (no MXU work in the hot loop).
    hpre0 = jnp.dot(w1t, cur0, preferred_element_type=jnp.float32) + b1  # (H, N)

    row_ids = lax.broadcasted_iota(jnp.int32, (D, N), 0)

    def round_body(r, carry):
        cur, hpre = carry                   # (D, N), (H, N) loop-carried vregs
        u_round = u_ref[r]                  # (D, N) pre-drawn uniforms, this round

        # Static unroll over axes (D small) -> scheduler can overlap the
        # EUP tanh / VPU update / compare work of consecutive axis steps.
        for i in range(D):
            old = cur[i:i + 1, :]           # (1, N)
            w1_col = w1t[:, i:i + 1]        # (H, 1)

            # Score every candidate value of coordinate i:
            #   pre_c = h_pre + (c - old) * W1[i, :]     (rank-1 VPU update)
            #   s_c   = sum_h tanh(pre_c) * w2           (EUP + sublane reduce)
            neg_s = []
            for c in range(n_choices):
                pre_c = hpre + w1_col * (jnp.float32(c) - old)               # (H, N)
                s_c = jnp.sum(jnp.tanh(pre_c) * w2, axis=0, keepdims=True)   # (1, N)
                neg_s.append(-s_c)

            # softmax(-score, dim=-1) over the choice axis, kept in registers.
            m = neg_s[0]
            for c in range(1, n_choices):
                m = jnp.maximum(m, neg_s[c])
            e = [jnp.exp(v - m) for v in neg_s]
            total = e[0]
            for c in range(1, n_choices):
                total = total + e[c]

            # Categorical draw (torch.multinomial(prob, 1)) via inverse CDF on
            # the UNnormalized weights: compare u * total against the running
            # sum -> no divide / reciprocal needed.
            t = u_round[i:i + 1, :] * total                  # (1, N)
            run = jnp.zeros((1, N), jnp.float32)
            idx = jnp.zeros((1, N), jnp.float32)
            for c in range(n_choices):
                run = run + e[c]
                idx = idx + (t >= run).astype(jnp.float32)
            idx = jnp.minimum(idx, jnp.float32(n_choices - 1))

            # cur[i, :] = sampled index; keep the pre-activation consistent.
            hpre = hpre + w1_col * (idx - old)
            cur = jnp.where(row_ids == i, idx, cur)

        return cur, hpre

    cur_final, _ = lax.fori_loop(0, num_rounds, round_body, (cur0, hpre0))
    out_ref[...] = cur_final.astype(jnp.int32)


def gibbs_sample(init_samples, w1, b1, w2, key, *, n_choices, num_rounds,
                 tile_n=128):
    """Full Gibbs sweep. init_samples: (N, D) int; returns (N, D) int32."""
    N, D = init_samples.shape
    H = w1.shape[1]

    # Chains-on-lanes layout.
    x_t = init_samples.astype(jnp.float32).T                 # (D, N)
    w1t = jnp.asarray(w1, jnp.float32).T                     # (H, D)
    b1c = jnp.asarray(b1, jnp.float32).reshape(H, 1)         # (H, 1)
    w2c = jnp.asarray(w2, jnp.float32).reshape(H, 1)         # (H, 1)

    # Pre-drawn, lane-dense uniforms: one (D, N) slab per Gibbs round.
    u = jax.random.uniform(key, (num_rounds, D, N), jnp.float32)

    if N % tile_n != 0:
        tile_n = N          # single full-extent block is always legal

    kernel = functools.partial(
        _gibbs_kernel, n_choices=n_choices, discrete_dim=D,
        num_rounds=num_rounds)

    out_t = pl.pallas_call(
        kernel,
        out_shape=jax.ShapeDtypeStruct((D, N), jnp.int32),
        grid=(N // tile_n,),
        in_specs=[
            pl.BlockSpec((D, tile_n), lambda b: (0, b)),                 # state
            pl.BlockSpec((H, D), lambda b: (0, 0)),                      # W1^T
            pl.BlockSpec((H, 1), lambda b: (0, 0)),                      # b1
            pl.BlockSpec((H, 1), lambda b: (0, 0)),                      # w2
            pl.BlockSpec((num_rounds, D, tile_n), lambda b: (0, 0, b)),  # uniforms
        ],
        out_specs=pl.BlockSpec((D, tile_n), lambda b: (0, b)),
        compiler_params=pltpu.CompilerParams(
            dimension_semantics=("parallel",)),
    )(x_t, w1t, b1c, w2c, u)
    return out_t.T


if __name__ == "__main__":
    # GibbsSampler(n_choices=4, discrete_dim=8, device=...)
    n_choices = 4
    discrete_dim = 8
    num_samples = 128          # chains; lane-dense (multiple of 128)
    hidden = 32
    num_rounds = 2

    key = jax.random.PRNGKey(0)
    k_init, k_w1, k_b1, k_w2, k_u = jax.random.split(key, 5)

    # init_samples ~ randint(n_choices, (num_samples, discrete_dim))
    init_samples = jax.random.randint(
        k_init, (num_samples, discrete_dim), 0, n_choices, dtype=jnp.int32)

    # Deterministic synthetic score_func parameters (row-wise MLP energy):
    #   score(x) = tanh(x @ W1 + b1) @ w2
    w1 = 0.1 * jax.random.normal(k_w1, (discrete_dim, hidden), jnp.float32)
    b1 = 0.1 * jax.random.normal(k_b1, (hidden,), jnp.float32)
    w2 = 0.1 * jax.random.normal(k_w2, (hidden,), jnp.float32)

    out = gibbs_sample(init_samples, w1, b1, w2, k_u,
                       n_choices=n_choices, num_rounds=num_rounds)
    out = jax.block_until_ready(out)

    assert out.shape == (num_samples, discrete_dim)
    assert out.dtype == jnp.int32
    assert bool((out >= 0).all()) and bool((out < n_choices).all())
    print("KERNEL_OK")
</pallas_src>

<mosaic_0001>
module attributes {stable_mosaic.version = 11 : i64} {
  func.func @_gibbs_kernel(%arg0: i32, %arg1: memref<8x128xf32, #tpu.memory_space<vmem>>, %arg2: memref<32x8xf32, #tpu.memory_space<vmem>>, %arg3: memref<32x1xf32, #tpu.memory_space<vmem>>, %arg4: memref<32x1xf32, #tpu.memory_space<vmem>>, %arg5: memref<2x8x128xf32, #tpu.memory_space<vmem>>, %arg6: memref<8x128xi32, #tpu.memory_space<vmem>>) attributes {dimension_semantics = [#tpu.dimension_semantics<parallel>], iteration_bounds = array<i64: 1>, scalar_prefetch = 0 : i64, scratch_operands = 0 : i64, tpu.core_type = #tpu.core_type<tc>, window_params = [{transform_indices = @transform_0, window_bounds = array<i64: 8, 128>}, {pipeline_mode = #tpu.pipeline_mode<synchronous>, transform_indices = @transform_1, window_bounds = array<i64: 32, 8>}, {pipeline_mode = #tpu.pipeline_mode<synchronous>, transform_indices = @transform_2, window_bounds = array<i64: 32, 1>}, {pipeline_mode = #tpu.pipeline_mode<synchronous>, transform_indices = @transform_3, window_bounds = array<i64: 32, 1>}, {transform_indices = @transform_4, window_bounds = array<i64: 2, 8, 128>}, {transform_indices = @transform_5, window_bounds = array<i64: 8, 128>}]} {
    %c0 = arith.constant 0 : index
    %c0_0 = arith.constant 0 : index
    %0 = vector.load %arg2[%c0, %c0_0] : memref<32x8xf32, #tpu.memory_space<vmem>>, vector<32x8xf32>
    %c0_1 = arith.constant 0 : index
    %c0_2 = arith.constant 0 : index
    %1 = vector.load %arg3[%c0_1, %c0_2] : memref<32x1xf32, #tpu.memory_space<vmem>>, vector<32x1xf32>
    %c0_3 = arith.constant 0 : index
    %c0_4 = arith.constant 0 : index
    %2 = vector.load %arg4[%c0_3, %c0_4] : memref<32x1xf32, #tpu.memory_space<vmem>>, vector<32x1xf32>
    %c0_5 = arith.constant 0 : index
    %c0_6 = arith.constant 0 : index
    %3 = vector.load %arg1[%c0_5, %c0_6] : memref<8x128xf32, #tpu.memory_space<vmem>>, vector<8x128xf32>
    %cst = arith.constant dense<0.000000e+00> : vector<32x128xf32>
    %4 = tpu.matmul %0, %3, %cst {dimension_numbers = #tpu.dot_dimension_numbers<[1], [0], [0], [1], [0, 0, 1, 1], [], []>} : vector<32x8xf32>, vector<8x128xf32>, vector<32x128xf32> -> vector<32x128xf32>
    %5 = vector.broadcast %1 : vector<32x1xf32> to vector<32x128xf32>
    %6 = arith.addf %4, %5 : vector<32x128xf32>
    %7 = tpu.iota {dimensions = array<i32: 0>} : vector<8x128xi32>
    %c0_i32 = arith.constant 0 : i32
    %c2_i32 = arith.constant 2 : i32
    %8 = arith.addi %c0_i32, %c2_i32 : i32
    %c1_i32 = arith.constant 1 : i32
    %9:2 = scf.for %arg7 = %c0_i32 to %8 step %c1_i32 iter_args(%arg8 = %3, %arg9 = %6) -> (vector<8x128xf32>, vector<32x128xf32>)  : i32 {
      %12 = arith.index_cast %arg7 : i32 to index
      %c0_10 = arith.constant 0 : index
      %c0_11 = arith.constant 0 : index
      %13 = vector.load %arg5[%12, %c0_10, %c0_11] : memref<2x8x128xf32, #tpu.memory_space<vmem>>, vector<1x8x128xf32>
      %14 = vector.shape_cast %13 : vector<1x8x128xf32> to vector<8x128xf32>
      %15 = vector.extract_strided_slice %arg8 {offsets = [0, 0], sizes = [1, 128], strides = [1, 1]} : vector<8x128xf32> to vector<1x128xf32>
      %16 = vector.extract_strided_slice %0 {offsets = [0, 0], sizes = [32, 1], strides = [1, 1]} : vector<32x8xf32> to vector<32x1xf32>
      %cst_12 = arith.constant 0.000000e+00 : f32
      %17 = vector.broadcast %cst_12 : f32 to vector<1x128xf32>
      %18 = arith.subf %17, %15 : vector<1x128xf32>
      %19 = vector.broadcast %16 : vector<32x1xf32> to vector<32x128xf32>
      %20 = vector.broadcast %18 : vector<1x128xf32> to vector<32x128xf32>
      %21 = arith.mulf %19, %20 : vector<32x128xf32>
      %22 = arith.addf %arg9, %21 : vector<32x128xf32>
      %23 = math.tanh %22 : vector<32x128xf32>
      %24 = vector.broadcast %2 : vector<32x1xf32> to vector<32x128xf32>
      %25 = arith.mulf %23, %24 : vector<32x128xf32>
      %cst_13 = arith.constant dense<0.000000e+00> : vector<128xf32>
      %26 = vector.multi_reduction <add>, %25, %cst_13 [0] : vector<32x128xf32> to vector<128xf32>
      %27 = vector.shape_cast %26 : vector<128xf32> to vector<1x128xf32>
      %cst_14 = arith.constant 0.000000e+00 : f32
      %28 = vector.broadcast %cst_14 : f32 to vector<1x128xf32>
      %29 = arith.subf %28, %27 : vector<1x128xf32>
      %cst_15 = arith.constant 1.000000e+00 : f32
      %30 = vector.broadcast %cst_15 : f32 to vector<1x128xf32>
      %31 = arith.subf %30, %15 : vector<1x128xf32>
      %32 = vector.broadcast %16 : vector<32x1xf32> to vector<32x128xf32>
      %33 = vector.broadcast %31 : vector<1x128xf32> to vector<32x128xf32>
      %34 = arith.mulf %32, %33 : vector<32x128xf32>
      %35 = arith.addf %arg9, %34 : vector<32x128xf32>
      %36 = math.tanh %35 : vector<32x128xf32>
      %37 = vector.broadcast %2 : vector<32x1xf32> to vector<32x128xf32>
      %38 = arith.mulf %36, %37 : vector<32x128xf32>
      %cst_16 = arith.constant dense<0.000000e+00> : vector<128xf32>
      %39 = vector.multi_reduction <add>, %38, %cst_16 [0] : vector<32x128xf32> to vector<128xf32>
      %40 = vector.shape_cast %39 : vector<128xf32> to vector<1x128xf32>
      %cst_17 = arith.constant 0.000000e+00 : f32
      %41 = vector.broadcast %cst_17 : f32 to vector<1x128xf32>
      %42 = arith.subf %41, %40 : vector<1x128xf32>
      %cst_18 = arith.constant 2.000000e+00 : f32
      %43 = vector.broadcast %cst_18 : f32 to vector<1x128xf32>
      %44 = arith.subf %43, %15 : vector<1x128xf32>
      %45 = vector.broadcast %16 : vector<32x1xf32> to vector<32x128xf32>
      %46 = vector.broadcast %44 : vector<1x128xf32> to vector<32x128xf32>
      %47 = arith.mulf %45, %46 : vector<32x128xf32>
      %48 = arith.addf %arg9, %47 : vector<32x128xf32>
      %49 = math.tanh %48 : vector<32x128xf32>
      %50 = vector.broadcast %2 : vector<32x1xf32> to vector<32x128xf32>
      %51 = arith.mulf %49, %50 : vector<32x128xf32>
      %cst_19 = arith.constant dense<0.000000e+00> : vector<128xf32>
      %52 = vector.multi_reduction <add>, %51, %cst_19 [0] : vector<32x128xf32> to vector<128xf32>
      %53 = vector.shape_cast %52 : vector<128xf32> to vector<1x128xf32>
      %cst_20 = arith.constant 0.000000e+00 : f32
      %54 = vector.broadcast %cst_20 : f32 to vector<1x128xf32>
      %55 = arith.subf %54, %53 : vector<1x128xf32>
      %cst_21 = arith.constant 3.000000e+00 : f32
      %56 = vector.broadcast %cst_21 : f32 to vector<1x128xf32>
      %57 = arith.subf %56, %15 : vector<1x128xf32>
      %58 = vector.broadcast %16 : vector<32x1xf32> to vector<32x128xf32>
      %59 = vector.broadcast %57 : vector<1x128xf32> to vector<32x128xf32>
      %60 = arith.mulf %58, %59 : vector<32x128xf32>
      %61 = arith.addf %arg9, %60 : vector<32x128xf32>
      %62 = math.tanh %61 : vector<32x128xf32>
      %63 = vector.broadcast %2 : vector<32x1xf32> to vector<32x128xf32>
      %64 = arith.mulf %62, %63 : vector<32x128xf32>
      %cst_22 = arith.constant dense<0.000000e+00> : vector<128xf32>
      %65 = vector.multi_reduction <add>, %64, %cst_22 [0] : vector<32x128xf32> to vector<128xf32>
      %66 = vector.shape_cast %65 : vector<128xf32> to vector<1x128xf32>
      %cst_23 = arith.constant 0.000000e+00 : f32
      %67 = vector.broadcast %cst_23 : f32 to vector<1x128xf32>
      %68 = arith.subf %67, %66 : vector<1x128xf32>
      %69 = arith.maximumf %29, %42 : vector<1x128xf32>
      %70 = arith.maximumf %69, %55 : vector<1x128xf32>
      %71 = arith.maximumf %70, %68 : vector<1x128xf32>
      %72 = arith.subf %29, %71 : vector<1x128xf32>
      %73 = math.exp %72 : vector<1x128xf32>
      %74 = arith.subf %42, %71 : vector<1x128xf32>
      %75 = math.exp %74 : vector<1x128xf32>
      %76 = arith.subf %55, %71 : vector<1x128xf32>
      %77 = math.exp %76 : vector<1x128xf32>
      %78 = arith.subf %68, %71 : vector<1x128xf32>
      %79 = math.exp %78 : vector<1x128xf32>
      %80 = arith.addf %73, %75 : vector<1x128xf32>
      %81 = arith.addf %80, %77 : vector<1x128xf32>
      %82 = arith.addf %81, %79 : vector<1x128xf32>
      %83 = vector.extract_strided_slice %14 {offsets = [0, 0], sizes = [1, 128], strides = [1, 1]} : vector<8x128xf32> to vector<1x128xf32>
      %84 = arith.mulf %83, %82 : vector<1x128xf32>
      %cst_24 = arith.constant 0.000000e+00 : f32
      %85 = vector.broadcast %cst_24 : f32 to vector<1x128xf32>
      %cst_25 = arith.constant 0.000000e+00 : f32
      %86 = vector.broadcast %cst_25 : f32 to vector<1x128xf32>
      %87 = arith.addf %85, %73 : vector<1x128xf32>
      %88 = arith.cmpf oge, %84, %87 : vector<1x128xf32>
      %89 = arith.extui %88 : vector<1x128xi1> to vector<1x128xi32>
      %90 = arith.sitofp %89 : vector<1x128xi32> to vector<1x128xf32>
      %91 = arith.addf %86, %90 : vector<1x128xf32>
      %92 = arith.addf %87, %75 : vector<1x128xf32>
      %93 = arith.cmpf oge, %84, %92 : vector<1x128xf32>
      %94 = arith.extui %93 : vector<1x128xi1> to vector<1x128xi32>
      %95 = arith.sitofp %94 : vector<1x128xi32> to vector<1x128xf32>
      %96 = arith.addf %91, %95 : vector<1x128xf32>
      %97 = arith.addf %92, %77 : vector<1x128xf32>
      %98 = arith.cmpf oge, %84, %97 : vector<1x128xf32>
      %99 = arith.extui %98 : vector<1x128xi1> to vector<1x128xi32>
      %100 = arith.sitofp %99 : vector<1x128xi32> to vector<1x128xf32>
      %101 = arith.addf %96, %100 : vector<1x128xf32>
      %102 = arith.addf %97, %79 : vector<1x128xf32>
      %103 = arith.cmpf oge, %84, %102 : vector<1x128xf32>
      %104 = arith.extui %103 : vector<1x128xi1> to vector<1x128xi32>
      %105 = arith.sitofp %104 : vector<1x128xi32> to vector<1x128xf32>
      %106 = arith.addf %101, %105 : vector<1x128xf32>
      %cst_26 = arith.constant 3.000000e+00 : f32
      %107 = vector.broadcast %cst_26 : f32 to vector<1x128xf32>
      %108 = arith.minimumf %106, %107 : vector<1x128xf32>
      %109 = arith.subf %108, %15 : vector<1x128xf32>
      %110 = vector.broadcast %16 : vector<32x1xf32> to vector<32x128xf32>
      %111 = vector.broadcast %109 : vector<1x128xf32> to vector<32x128xf32>
      %112 = arith.mulf %110, %111 : vector<32x128xf32>
      %113 = arith.addf %arg9, %112 : vector<32x128xf32>
      %c0_i32_27 = arith.constant 0 : i32
      %114 = vector.broadcast %c0_i32_27 : i32 to vector<8x128xi32>
      %115 = arith.cmpi eq, %7, %114 : vector<8x128xi32>
      %116 = vector.shape_cast %108 : vector<1x128xf32> to vector<1x128xf32>
      %117 = vector.broadcast %116 : vector<1x128xf32> to vector<8x128xf32>
      %118 = arith.select %115, %117, %arg8 : vector<8x128xi1>, vector<8x128xf32>
      %119 = vector.extract_strided_slice %118 {offsets = [1, 0], sizes = [1, 128], strides = [1, 1]} : vector<8x128xf32> to vector<1x128xf32>
      %120 = vector.extract_strided_slice %0 {offsets = [0, 1], sizes = [32, 1], strides = [1, 1]} : vector<32x8xf32> to vector<32x1xf32>
      %cst_28 = arith.constant 0.000000e+00 : f32
      %121 = vector.broadcast %cst_28 : f32 to vector<1x128xf32>
      %122 = arith.subf %121, %119 : vector<1x128xf32>
      %123 = vector.broadcast %120 : vector<32x1xf32> to vector<32x128xf32>
      %124 = vector.broadcast %122 : vector<1x128xf32> to vector<32x128xf32>
      %125 = arith.mulf %123, %124 : vector<32x128xf32>
      %126 = arith.addf %113, %125 : vector<32x128xf32>
      %127 = math.tanh %126 : vector<32x128xf32>
      %128 = vector.broadcast %2 : vector<32x1xf32> to vector<32x128xf32>
      %129 = arith.mulf %127, %128 : vector<32x128xf32>
      %cst_29 = arith.constant dense<0.000000e+00> : vector<128xf32>
      %130 = vector.multi_reduction <add>, %129, %cst_29 [0] : vector<32x128xf32> to vector<128xf32>
      %131 = vector.shape_cast %130 : vector<128xf32> to vector<1x128xf32>
      %cst_30 = arith.constant 0.000000e+00 : f32
      %132 = vector.broadcast %cst_30 : f32 to vector<1x128xf32>
      %133 = arith.subf %132, %131 : vector<1x128xf32>
      %cst_31 = arith.constant 1.000000e+00 : f32
      %134 = vector.broadcast %cst_31 : f32 to vector<1x128xf32>
      %135 = arith.subf %134, %119 : vector<1x128xf32>
      %136 = vector.broadcast %120 : vector<32x1xf32> to vector<32x128xf32>
      %137 = vector.broadcast %135 : vector<1x128xf32> to vector<32x128xf32>
      %138 = arith.mulf %136, %137 : vector<32x128xf32>
      %139 = arith.addf %113, %138 : vector<32x128xf32>
      %140 = math.tanh %139 : vector<32x128xf32>
      %141 = vector.broadcast %2 : vector<32x1xf32> to vector<32x128xf32>
      %142 = arith.mulf %140, %141 : vector<32x128xf32>
      %cst_32 = arith.constant dense<0.000000e+00> : vector<128xf32>
      %143 = vector.multi_reduction <add>, %142, %cst_32 [0] : vector<32x128xf32> to vector<128xf32>
      %144 = vector.shape_cast %143 : vector<128xf32> to vector<1x128xf32>
      %cst_33 = arith.constant 0.000000e+00 : f32
      %145 = vector.broadcast %cst_33 : f32 to vector<1x128xf32>
      %146 = arith.subf %145, %144 : vector<1x128xf32>
      %cst_34 = arith.constant 2.000000e+00 : f32
      %147 = vector.broadcast %cst_34 : f32 to vector<1x128xf32>
      %148 = arith.subf %147, %119 : vector<1x128xf32>
      %149 = vector.broadcast %120 : vector<32x1xf32> to vector<32x128xf32>
      %150 = vector.broadcast %148 : vector<1x128xf32> to vector<32x128xf32>
      %151 = arith.mulf %149, %150 : vector<32x128xf32>
      %152 = arith.addf %113, %151 : vector<32x128xf32>
      %153 = math.tanh %152 : vector<32x128xf32>
      %154 = vector.broadcast %2 : vector<32x1xf32> to vector<32x128xf32>
      %155 = arith.mulf %153, %154 : vector<32x128xf32>
      %cst_35 = arith.constant dense<0.000000e+00> : vector<128xf32>
      %156 = vector.multi_reduction <add>, %155, %cst_35 [0] : vector<32x128xf32> to vector<128xf32>
      %157 = vector.shape_cast %156 : vector<128xf32> to vector<1x128xf32>
      %cst_36 = arith.constant 0.000000e+00 : f32
      %158 = vector.broadcast %cst_36 : f32 to vector<1x128xf32>
      %159 = arith.subf %158, %157 : vector<1x128xf32>
      %cst_37 = arith.constant 3.000000e+00 : f32
      %160 = vector.broadcast %cst_37 : f32 to vector<1x128xf32>
      %161 = arith.subf %160, %119 : vector<1x128xf32>
      %162 = vector.broadcast %120 : vector<32x1xf32> to vector<32x128xf32>
      %163 = vector.broadcast %161 : vector<1x128xf32> to vector<32x128xf32>
      %164 = arith.mulf %162, %163 : vector<32x128xf32>
      %165 = arith.addf %113, %164 : vector<32x128xf32>
      %166 = math.tanh %165 : vector<32x128xf32>
      %167 = vector.broadcast %2 : vector<32x1xf32> to vector<32x128xf32>
      %168 = arith.mulf %166, %167 : vector<32x128xf32>
      %cst_38 = arith.constant dense<0.000000e+00> : vector<128xf32>
      %169 = vector.multi_reduction <add>, %168, %cst_38 [0] : vector<32x128xf32> to vector<128xf32>
      %170 = vector.shape_cast %169 : vector<128xf32> to vector<1x128xf32>
      %cst_39 = arith.constant 0.000000e+00 : f32
      %171 = vector.broadcast %cst_39 : f32 to vector<1x128xf32>
      %172 = arith.subf %171, %170 : vector<1x128xf32>
      %173 = arith.maximumf %133, %146 : vector<1x128xf32>
      %174 = arith.maximumf %173, %159 : vector<1x128xf32>
      %175 = arith.maximumf %174, %172 : vector<1x128xf32>
      %176 = arith.subf %133, %175 : vector<1x128xf32>
      %177 = math.exp %176 : vector<1x128xf32>
      %178 = arith.subf %146, %175 : vector<1x128xf32>
      %179 = math.exp %178 : vector<1x128xf32>
      %180 = arith.subf %159, %175 : vector<1x128xf32>
      %181 = math.exp %180 : vector<1x128xf32>
      %182 = arith.subf %172, %175 : vector<1x128xf32>
      %183 = math.exp %182 : vector<1x128xf32>
      %184 = arith.addf %177, %179 : vector<1x128xf32>
      %185 = arith.addf %184, %181 : vector<1x128xf32>
      %186 = arith.addf %185, %183 : vector<1x128xf32>
      %187 = vector.extract_strided_slice %14 {offsets = [1, 0], sizes = [1, 128], strides = [1, 1]} : vector<8x128xf32> to vector<1x128xf32>
      %188 = arith.mulf %187, %186 : vector<1x128xf32>
      %cst_40 = arith.constant 0.000000e+00 : f32
      %189 = vector.broadcast %cst_40 : f32 to vector<1x128xf32>
      %cst_41 = arith.constant 0.000000e+00 : f32
      %190 = vector.broadcast %cst_41 : f32 to vector<1x128xf32>
      %191 = arith.addf %189, %177 : vector<1x128xf32>
      %192 = arith.cmpf oge, %188, %191 : vector<1x128xf32>
      %193 = arith.extui %192 : vector<1x128xi1> to vector<1x128xi32>
      %194 = arith.sitofp %193 : vector<1x128xi32> to vector<1x128xf32>
      %195 = arith.addf %190, %194 : vector<1x128xf32>
      %196 = arith.addf %191, %179 : vector<1x128xf32>
      %197 = arith.cmpf oge, %188, %196 : vector<1x128xf32>
      %198 = arith.extui %197 : vector<1x128xi1> to vector<1x128xi32>
      %199 = arith.sitofp %198 : vector<1x128xi32> to vector<1x128xf32>
      %200 = arith.addf %195, %199 : vector<1x128xf32>
      %201 = arith.addf %196, %181 : vector<1x128xf32>
      %202 = arith.cmpf oge, %188, %201 : vector<1x128xf32>
      %203 = arith.extui %202 : vector<1x128xi1> to vector<1x128xi32>
      %204 = arith.sitofp %203 : vector<1x128xi32> to vector<1x128xf32>
      %205 = arith.addf %200, %204 : vector<1x128xf32>
      %206 = arith.addf %201, %183 : vector<1x128xf32>
      %207 = arith.cmpf oge, %188, %206 : vector<1x128xf32>
      %208 = arith.extui %207 : vector<1x128xi1> to vector<1x128xi32>
      %209 = arith.sitofp %208 : vector<1x128xi32> to vector<1x128xf32>
      %210 = arith.addf %205, %209 : vector<1x128xf32>
      %cst_42 = arith.constant 3.000000e+00 : f32
      %211 = vector.broadcast %cst_42 : f32 to vector<1x128xf32>
      %212 = arith.minimumf %210, %211 : vector<1x128xf32>
      %213 = arith.subf %212, %119 : vector<1x128xf32>
      %214 = vector.broadcast %120 : vector<32x1xf32> to vector<32x128xf32>
      %215 = vector.broadcast %213 : vector<1x128xf32> to vector<32x128xf32>
      %216 = arith.mulf %214, %215 : vector<32x128xf32>
      %217 = arith.addf %113, %216 : vector<32x128xf32>
      %c1_i32_43 = arith.constant 1 : i32
      %218 = vector.broadcast %c1_i32_43 : i32 to vector<8x128xi32>
      %219 = arith.cmpi eq, %7, %218 : vector<8x128xi32>
      %220 = vector.shape_cast %212 : vector<1x128xf32> to vector<1x128xf32>
      %221 = vector.broadcast %220 : vector<1x128xf32> to vector<8x128xf32>
      %222 = arith.select %219, %221, %118 : vector<8x128xi1>, vector<8x128xf32>
      %223 = vector.extract_strided_slice %222 {offsets = [2, 0], sizes = [1, 128], strides = [1, 1]} : vector<8x128xf32> to vector<1x128xf32>
      %224 = vector.extract_strided_slice %0 {offsets = [0, 2], sizes = [32, 1], strides = [1, 1]} : vector<32x8xf32> to vector<32x1xf32>
      %cst_44 = arith.constant 0.000000e+00 : f32
      %225 = vector.broadcast %cst_44 : f32 to vector<1x128xf32>
      %226 = arith.subf %225, %223 : vector<1x128xf32>
      %227 = vector.broadcast %224 : vector<32x1xf32> to vector<32x128xf32>
      %228 = vector.broadcast %226 : vector<1x128xf32> to vector<32x128xf32>
      %229 = arith.mulf %227, %228 : vector<32x128xf32>
      %230 = arith.addf %217, %229 : vector<32x128xf32>
      %231 = math.tanh %230 : vector<32x128xf32>
      %232 = vector.broadcast %2 : vector<32x1xf32> to vector<32x128xf32>
      %233 = arith.mulf %231, %232 : vector<32x128xf32>
      %cst_45 = arith.constant dense<0.000000e+00> : vector<128xf32>
      %234 = vector.multi_reduction <add>, %233, %cst_45 [0] : vector<32x128xf32> to vector<128xf32>
      %235 = vector.shape_cast %234 : vector<128xf32> to vector<1x128xf32>
      %cst_46 = arith.constant 0.000000e+00 : f32
      %236 = vector.broadcast %cst_46 : f32 to vector<1x128xf32>
      %237 = arith.subf %236, %235 : vector<1x128xf32>
      %cst_47 = arith.constant 1.000000e+00 : f32
      %238 = vector.broadcast %cst_47 : f32 to vector<1x128xf32>
      %239 = arith.subf %238, %223 : vector<1x128xf32>
      %240 = vector.broadcast %224 : vector<32x1xf32> to vector<32x128xf32>
      %241 = vector.broadcast %239 : vector<1x128xf32> to vector<32x128xf32>
      %242 = arith.mulf %240, %241 : vector<32x128xf32>
      %243 = arith.addf %217, %242 : vector<32x128xf32>
      %244 = math.tanh %243 : vector<32x128xf32>
      %245 = vector.broadcast %2 : vector<32x1xf32> to vector<32x128xf32>
      %246 = arith.mulf %244, %245 : vector<32x128xf32>
      %cst_48 = arith.constant dense<0.000000e+00> : vector<128xf32>
      %247 = vector.multi_reduction <add>, %246, %cst_48 [0] : vector<32x128xf32> to vector<128xf32>
      %248 = vector.shape_cast %247 : vector<128xf32> to vector<1x128xf32>
      %cst_49 = arith.constant 0.000000e+00 : f32
      %249 = vector.broadcast %cst_49 : f32 to vector<1x128xf32>
      %250 = arith.subf %249, %248 : vector<1x128xf32>
      %cst_50 = arith.constant 2.000000e+00 : f32
      %251 = vector.broadcast %cst_50 : f32 to vector<1x128xf32>
      %252 = arith.subf %251, %223 : vector<1x128xf32>
      %253 = vector.broadcast %224 : vector<32x1xf32> to vector<32x128xf32>
      %254 = vector.broadcast %252 : vector<1x128xf32> to vector<32x128xf32>
      %255 = arith.mulf %253, %254 : vector<32x128xf32>
      %256 = arith.addf %217, %255 : vector<32x128xf32>
      %257 = math.tanh %256 : vector<32x128xf32>
      %258 = vector.broadcast %2 : vector<32x1xf32> to vector<32x128xf32>
      %259 = arith.mulf %257, %258 : vector<32x128xf32>
      %cst_51 = arith.constant dense<0.000000e+00> : vector<128xf32>
      %260 = vector.multi_reduction <add>, %259, %cst_51 [0] : vector<32x128xf32> to vector<128xf32>
      %261 = vector.shape_cast %260 : vector<128xf32> to vector<1x128xf32>
      %cst_52 = arith.constant 0.000000e+00 : f32
      %262 = vector.broadcast %cst_52 : f32 to vector<1x128xf32>
      %263 = arith.subf %262, %261 : vector<1x128xf32>
      %cst_53 = arith.constant 3.000000e+00 : f32
      %264 = vector.broadcast %cst_53 : f32 to vector<1x128xf32>
      %265 = arith.subf %264, %223 : vector<1x128xf32>
      %266 = vector.broadcast %224 : vector<32x1xf32> to vector<32x128xf32>
      %267 = vector.broadcast %265 : vector<1x128xf32> to vector<32x128xf32>
      %268 = arith.mulf %266, %267 : vector<32x128xf32>
      %269 = arith.addf %217, %268 : vector<32x128xf32>
      %270 = math.tanh %269 : vector<32x128xf32>
      %271 = vector.broadcast %2 : vector<32x1xf32> to vector<32x128xf32>
      %272 = arith.mulf %270, %271 : vector<32x128xf32>
      %cst_54 = arith.constant dense<0.000000e+00> : vector<128xf32>
      %273 = vector.multi_reduction <add>, %272, %cst_54 [0] : vector<32x128xf32> to vector<128xf32>
      %274 = vector.shape_cast %273 : vector<128xf32> to vector<1x128xf32>
      %cst_55 = arith.constant 0.000000e+00 : f32
      %275 = vector.broadcast %cst_55 : f32 to vector<1x128xf32>
      %276 = arith.subf %275, %274 : vector<1x128xf32>
      %277 = arith.maximumf %237, %250 : vector<1x128xf32>
      %278 = arith.maximumf %277, %263 : vector<1x128xf32>
      %279 = arith.maximumf %278, %276 : vector<1x128xf32>
      %280 = arith.subf %237, %279 : vector<1x128xf32>
      %281 = math.exp %280 : vector<1x128xf32>
      %282 = arith.subf %250, %279 : vector<1x128xf32>
      %283 = math.exp %282 : vector<1x128xf32>
      %284 = arith.subf %263, %279 : vector<1x128xf32>
      %285 = math.exp %284 : vector<1x128xf32>
      %286 = arith.subf %276, %279 : vector<1x128xf32>
      %287 = math.exp %286 : vector<1x128xf32>
      %288 = arith.addf %281, %283 : vector<1x128xf32>
      %289 = arith.addf %288, %285 : vector<1x128xf32>
      %290 = arith.addf %289, %287 : vector<1x128xf32>
      %291 = vector.extract_strided_slice %14 {offsets = [2, 0], sizes = [1, 128], strides = [1, 1]} : vector<8x128xf32> to vector<1x128xf32>
      %292 = arith.mulf %291, %290 : vector<1x128xf32>
      %cst_56 = arith.constant 0.000000e+00 : f32
      %293 = vector.broadcast %cst_56 : f32 to vector<1x128xf32>
      %cst_57 = arith.constant 0.000000e+00 : f32
      %294 = vector.broadcast %cst_57 : f32 to vector<1x128xf32>
      %295 = arith.addf %293, %281 : vector<1x128xf32>
      %296 = arith.cmpf oge, %292, %295 : vector<1x128xf32>
      %297 = arith.extui %296 : vector<1x128xi1> to vector<1x128xi32>
      %298 = arith.sitofp %297 : vector<1x128xi32> to vector<1x128xf32>
      %299 = arith.addf %294, %298 : vector<1x128xf32>
      %300 = arith.addf %295, %283 : vector<1x128xf32>
      %301 = arith.cmpf oge, %292, %300 : vector<1x128xf32>
      %302 = arith.extui %301 : vector<1x128xi1> to vector<1x128xi32>
      %303 = arith.sitofp %302 : vector<1x128xi32> to vector<1x128xf32>
      %304 = arith.addf %299, %303 : vector<1x128xf32>
      %305 = arith.addf %300, %285 : vector<1x128xf32>
      %306 = arith.cmpf oge, %292, %305 : vector<1x128xf32>
      %307 = arith.extui %306 : vector<1x128xi1> to vector<1x128xi32>
      %308 = arith.sitofp %307 : vector<1x128xi32> to vector<1x128xf32>
      %309 = arith.addf %304, %308 : vector<1x128xf32>
      %310 = arith.addf %305, %287 : vector<1x128xf32>
      %311 = arith.cmpf oge, %292, %310 : vector<1x128xf32>
      %312 = arith.extui %311 : vector<1x128xi1> to vector<1x128xi32>
      %313 = arith.sitofp %312 : vector<1x128xi32> to vector<1x128xf32>
      %314 = arith.addf %309, %313 : vector<1x128xf32>
      %cst_58 = arith.constant 3.000000e+00 : f32
      %315 = vector.broadcast %cst_58 : f32 to vector<1x128xf32>
      %316 = arith.minimumf %314, %315 : vector<1x128xf32>
      %317 = arith.subf %316, %223 : vector<1x128xf32>
      %318 = vector.broadcast %224 : vector<32x1xf32> to vector<32x128xf32>
      %319 = vector.broadcast %317 : vector<1x128xf32> to vector<32x128xf32>
      %320 = arith.mulf %318, %319 : vector<32x128xf32>
      %321 = arith.addf %217, %320 : vector<32x128xf32>
      %c2_i32_59 = arith.constant 2 : i32
      %322 = vector.broadcast %c2_i32_59 : i32 to vector<8x128xi32>
      %323 = arith.cmpi eq, %7, %322 : vector<8x128xi32>
      %324 = vector.shape_cast %316 : vector<1x128xf32> to vector<1x128xf32>
      %325 = vector.broadcast %324 : vector<1x128xf32> to vector<8x128xf32>
      %326 = arith.select %323, %325, %222 : vector<8x128xi1>, vector<8x128xf32>
      %327 = vector.extract_strided_slice %326 {offsets = [3, 0], sizes = [1, 128], strides = [1, 1]} : vector<8x128xf32> to vector<1x128xf32>
      %328 = vector.extract_strided_slice %0 {offsets = [0, 3], sizes = [32, 1], strides = [1, 1]} : vector<32x8xf32> to vector<32x1xf32>
      %cst_60 = arith.constant 0.000000e+00 : f32
      %329 = vector.broadcast %cst_60 : f32 to vector<1x128xf32>
      %330 = arith.subf %329, %327 : vector<1x128xf32>
      %331 = vector.broadcast %328 : vector<32x1xf32> to vector<32x128xf32>
      %332 = vector.broadcast %330 : vector<1x128xf32> to vector<32x128xf32>
      %333 = arith.mulf %331, %332 : vector<32x128xf32>
      %334 = arith.addf %321, %333 : vector<32x128xf32>
      %335 = math.tanh %334 : vector<32x128xf32>
      %336 = vector.broadcast %2 : vector<32x1xf32> to vector<32x128xf32>
      %337 = arith.mulf %335, %336 : vector<32x128xf32>
      %cst_61 = arith.constant dense<0.000000e+00> : vector<128xf32>
      %338 = vector.multi_reduction <add>, %337, %cst_61 [0] : vector<32x128xf32> to vector<128xf32>
      %339 = vector.shape_cast %338 : vector<128xf32> to vector<1x128xf32>
      %cst_62 = arith.constant 0.000000e+00 : f32
      %340 = vector.broadcast %cst_62 : f32 to vector<1x128xf32>
      %341 = arith.subf %340, %339 : vector<1x128xf32>
      %cst_63 = arith.constant 1.000000e+00 : f32
      %342 = vector.broadcast %cst_63 : f32 to vector<1x128xf32>
      %343 = arith.subf %342, %327 : vector<1x128xf32>
      %344 = vector.broadcast %328 : vector<32x1xf32> to vector<32x128xf32>
      %345 = vector.broadcast %343 : vector<1x128xf32> to vector<32x128xf32>
      %346 = arith.mulf %344, %345 : vector<32x128xf32>
      %347 = arith.addf %321, %346 : vector<32x128xf32>
      %348 = math.tanh %347 : vector<32x128xf32>
      %349 = vector.broadcast %2 : vector<32x1xf32> to vector<32x128xf32>
      %350 = arith.mulf %348, %349 : vector<32x128xf32>
      %cst_64 = arith.constant dense<0.000000e+00> : vector<128xf32>
      %351 = vector.multi_reduction <add>, %350, %cst_64 [0] : vector<32x128xf32> to vector<128xf32>
      %352 = vector.shape_cast %351 : vector<128xf32> to vector<1x128xf32>
      %cst_65 = arith.constant 0.000000e+00 : f32
      %353 = vector.broadcast %cst_65 : f32 to vector<1x128xf32>
      %354 = arith.subf %353, %352 : vector<1x128xf32>
      %cst_66 = arith.constant 2.000000e+00 : f32
      %355 = vector.broadcast %cst_66 : f32 to vector<1x128xf32>
      %356 = arith.subf %355, %327 : vector<1x128xf32>
      %357 = vector.broadcast %328 : vector<32x1xf32> to vector<32x128xf32>
      %358 = vector.broadcast %356 : vector<1x128xf32> to vector<32x128xf32>
      %359 = arith.mulf %357, %358 : vector<32x128xf32>
      %360 = arith.addf %321, %359 : vector<32x128xf32>
      %361 = math.tanh %360 : vector<32x128xf32>
      %362 = vector.broadcast %2 : vector<32x1xf32> to vector<32x128xf32>
      %363 = arith.mulf %361, %362 : vector<32x128xf32>
      %cst_67 = arith.constant dense<0.000000e+00> : vector<128xf32>
      %364 = vector.multi_reduction <add>, %363, %cst_67 [0] : vector<32x128xf32> to vector<128xf32>
      %365 = vector.shape_cast %364 : vector<128xf32> to vector<1x128xf32>
      %cst_68 = arith.constant 0.000000e+00 : f32
      %366 = vector.broadcast %cst_68 : f32 to vector<1x128xf32>
      %367 = arith.subf %366, %365 : vector<1x128xf32>
      %cst_69 = arith.constant 3.000000e+00 : f32
      %368 = vector.broadcast %cst_69 : f32 to vector<1x128xf32>
      %369 = arith.subf %368, %327 : vector<1x128xf32>
      %370 = vector.broadcast %328 : vector<32x1xf32> to vector<32x128xf32>
      %371 = vector.broadcast %369 : vector<1x128xf32> to vector<32x128xf32>
      %372 = arith.mulf %370, %371 : vector<32x128xf32>
      %373 = arith.addf %321, %372 : vector<32x128xf32>
      %374 = math.tanh %373 : vector<32x128xf32>
      %375 = vector.broadcast %2 : vector<32x1xf32> to vector<32x128xf32>
      %376 = arith.mulf %374, %375 : vector<32x128xf32>
      %cst_70 = arith.constant dense<0.000000e+00> : vector<128xf32>
      %377 = vector.multi_reduction <add>, %376, %cst_70 [0] : vector<32x128xf32> to vector<128xf32>
      %378 = vector.shape_cast %377 : vector<128xf32> to vector<1x128xf32>
      %cst_71 = arith.constant 0.000000e+00 : f32
      %379 = vector.broadcast %cst_71 : f32 to vector<1x128xf32>
      %380 = arith.subf %379, %378 : vector<1x128xf32>
      %381 = arith.maximumf %341, %354 : vector<1x128xf32>
      %382 = arith.maximumf %381, %367 : vector<1x128xf32>
      %383 = arith.maximumf %382, %380 : vector<1x128xf32>
      %384 = arith.subf %341, %383 : vector<1x128xf32>
      %385 = math.exp %384 : vector<1x128xf32>
      %386 = arith.subf %354, %383 : vector<1x128xf32>
      %387 = math.exp %386 : vector<1x128xf32>
      %388 = arith.subf %367, %383 : vector<1x128xf32>
      %389 = math.exp %388 : vector<1x128xf32>
      %390 = arith.subf %380, %383 : vector<1x128xf32>
      %391 = math.exp %390 : vector<1x128xf32>
      %392 = arith.addf %385, %387 : vector<1x128xf32>
      %393 = arith.addf %392, %389 : vector<1x128xf32>
      %394 = arith.addf %393, %391 : vector<1x128xf32>
      %395 = vector.extract_strided_slice %14 {offsets = [3, 0], sizes = [1, 128], strides = [1, 1]} : vector<8x128xf32> to vector<1x128xf32>
      %396 = arith.mulf %395, %394 : vector<1x128xf32>
      %cst_72 = arith.constant 0.000000e+00 : f32
      %397 = vector.broadcast %cst_72 : f32 to vector<1x128xf32>
      %cst_73 = arith.constant 0.000000e+00 : f32
      %398 = vector.broadcast %cst_73 : f32 to vector<1x128xf32>
      %399 = arith.addf %397, %385 : vector<1x128xf32>
      %400 = arith.cmpf oge, %396, %399 : vector<1x128xf32>
      %401 = arith.extui %400 : vector<1x128xi1> to vector<1x128xi32>
      %402 = arith.sitofp %401 : vector<1x128xi32> to vector<1x128xf32>
      %403 = arith.addf %398, %402 : vector<1x128xf32>
      %404 = arith.addf %399, %387 : vector<1x128xf32>
      %405 = arith.cmpf oge, %396, %404 : vector<1x128xf32>
      %406 = arith.extui %405 : vector<1x128xi1> to vector<1x128xi32>
      %407 = arith.sitofp %406 : vector<1x128xi32> to vector<1x128xf32>
      %408 = arith.addf %403, %407 : vector<1x128xf32>
      %409 = arith.addf %404, %389 : vector<1x128xf32>
      %410 = arith.cmpf oge, %396, %409 : vector<1x128xf32>
      %411 = arith.extui %410 : vector<1x128xi1> to vector<1x128xi32>
      %412 = arith.sitofp %411 : vector<1x128xi32> to vector<1x128xf32>
      %413 = arith.addf %408, %412 : vector<1x128xf32>
      %414 = arith.addf %409, %391 : vector<1x128xf32>
      %415 = arith.cmpf oge, %396, %414 : vector<1x128xf32>
      %416 = arith.extui %415 : vector<1x128xi1> to vector<1x128xi32>
      %417 = arith.sitofp %416 : vector<1x128xi32> to vector<1x128xf32>
      %418 = arith.addf %413, %417 : vector<1x128xf32>
      %cst_74 = arith.constant 3.000000e+00 : f32
      %419 = vector.broadcast %cst_74 : f32 to vector<1x128xf32>
      %420 = arith.minimumf %418, %419 : vector<1x128xf32>
      %421 = arith.subf %420, %327 : vector<1x128xf32>
      %422 = vector.broadcast %328 : vector<32x1xf32> to vector<32x128xf32>
      %423 = vector.broadcast %421 : vector<1x128xf32> to vector<32x128xf32>
      %424 = arith.mulf %422, %423 : vector<32x128xf32>
      %425 = arith.addf %321, %424 : vector<32x128xf32>
      %c3_i32 = arith.constant 3 : i32
      %426 = vector.broadcast %c3_i32 : i32 to vector<8x128xi32>
      %427 = arith.cmpi eq, %7, %426 : vector<8x128xi32>
      %428 = vector.shape_cast %420 : vector<1x128xf32> to vector<1x128xf32>
      %429 = vector.broadcast %428 : vector<1x128xf32> to vector<8x128xf32>
      %430 = arith.select %427, %429, %326 : vector<8x128xi1>, vector<8x128xf32>
      %431 = vector.extract_strided_slice %430 {offsets = [4, 0], sizes = [1, 128], strides = [1, 1]} : vector<8x128xf32> to vector<1x128xf32>
      %432 = vector.extract_strided_slice %0 {offsets = [0, 4], sizes = [32, 1], strides = [1, 1]} : vector<32x8xf32> to vector<32x1xf32>
      %cst_75 = arith.constant 0.000000e+00 : f32
      %433 = vector.broadcast %cst_75 : f32 to vector<1x128xf32>
      %434 = arith.subf %433, %431 : vector<1x128xf32>
      %435 = vector.broadcast %432 : vector<32x1xf32> to vector<32x128xf32>
      %436 = vector.broadcast %434 : vector<1x128xf32> to vector<32x128xf32>
      %437 = arith.mulf %435, %436 : vector<32x128xf32>
      %438 = arith.addf %425, %437 : vector<32x128xf32>
      %439 = math.tanh %438 : vector<32x128xf32>
      %440 = vector.broadcast %2 : vector<32x1xf32> to vector<32x128xf32>
      %441 = arith.mulf %439, %440 : vector<32x128xf32>
      %cst_76 = arith.constant dense<0.000000e+00> : vector<128xf32>
      %442 = vector.multi_reduction <add>, %441, %cst_76 [0] : vector<32x128xf32> to vector<128xf32>
      %443 = vector.shape_cast %442 : vector<128xf32> to vector<1x128xf32>
      %cst_77 = arith.constant 0.000000e+00 : f32
      %444 = vector.broadcast %cst_77 : f32 to vector<1x128xf32>
      %445 = arith.subf %444, %443 : vector<1x128xf32>
      %cst_78 = arith.constant 1.000000e+00 : f32
      %446 = vector.broadcast %cst_78 : f32 to vector<1x128xf32>
      %447 = arith.subf %446, %431 : vector<1x128xf32>
      %448 = vector.broadcast %432 : vector<32x1xf32> to vector<32x128xf32>
      %449 = vector.broadcast %447 : vector<1x128xf32> to vector<32x128xf32>
      %450 = arith.mulf %448, %449 : vector<32x128xf32>
      %451 = arith.addf %425, %450 : vector<32x128xf32>
      %452 = math.tanh %451 : vector<32x128xf32>
      %453 = vector.broadcast %2 : vector<32x1xf32> to vector<32x128xf32>
      %454 = arith.mulf %452, %453 : vector<32x128xf32>
      %cst_79 = arith.constant dense<0.000000e+00> : vector<128xf32>
      %455 = vector.multi_reduction <add>, %454, %cst_79 [0] : vector<32x128xf32> to vector<128xf32>
      %456 = vector.shape_cast %455 : vector<128xf32> to vector<1x128xf32>
      %cst_80 = arith.constant 0.000000e+00 : f32
      %457 = vector.broadcast %cst_80 : f32 to vector<1x128xf32>
      %458 = arith.subf %457, %456 : vector<1x128xf32>
      %cst_81 = arith.constant 2.000000e+00 : f32
      %459 = vector.broadcast %cst_81 : f32 to vector<1x128xf32>
      %460 = arith.subf %459, %431 : vector<1x128xf32>
      %461 = vector.broadcast %432 : vector<32x1xf32> to vector<32x128xf32>
      %462 = vector.broadcast %460 : vector<1x128xf32> to vector<32x128xf32>
      %463 = arith.mulf %461, %462 : vector<32x128xf32>
      %464 = arith.addf %425, %463 : vector<32x128xf32>
      %465 = math.tanh %464 : vector<32x128xf32>
      %466 = vector.broadcast %2 : vector<32x1xf32> to vector<32x128xf32>
      %467 = arith.mulf %465, %466 : vector<32x128xf32>
      %cst_82 = arith.constant dense<0.000000e+00> : vector<128xf32>
      %468 = vector.multi_reduction <add>, %467, %cst_82 [0] : vector<32x128xf32> to vector<128xf32>
      %469 = vector.shape_cast %468 : vector<128xf32> to vector<1x128xf32>
      %cst_83 = arith.constant 0.000000e+00 : f32
      %470 = vector.broadcast %cst_83 : f32 to vector<1x128xf32>
      %471 = arith.subf %470, %469 : vector<1x128xf32>
      %cst_84 = arith.constant 3.000000e+00 : f32
      %472 = vector.broadcast %cst_84 : f32 to vector<1x128xf32>
      %473 = arith.subf %472, %431 : vector<1x128xf32>
      %474 = vector.broadcast %432 : vector<32x1xf32> to vector<32x128xf32>
      %475 = vector.broadcast %473 : vector<1x128xf32> to vector<32x128xf32>
      %476 = arith.mulf %474, %475 : vector<32x128xf32>
      %477 = arith.addf %425, %476 : vector<32x128xf32>
      %478 = math.tanh %477 : vector<32x128xf32>
      %479 = vector.broadcast %2 : vector<32x1xf32> to vector<32x128xf32>
      %480 = arith.mulf %478, %479 : vector<32x128xf32>
      %cst_85 = arith.constant dense<0.000000e+00> : vector<128xf32>
      %481 = vector.multi_reduction <add>, %480, %cst_85 [0] : vector<32x128xf32> to vector<128xf32>
      %482 = vector.shape_cast %481 : vector<128xf32> to vector<1x128xf32>
      %cst_86 = arith.constant 0.000000e+00 : f32
      %483 = vector.broadcast %cst_86 : f32 to vector<1x128xf32>
      %484 = arith.subf %483, %482 : vector<1x128xf32>
      %485 = arith.maximumf %445, %458 : vector<1x128xf32>
      %486 = arith.maximumf %485, %471 : vector<1x128xf32>
      %487 = arith.maximumf %486, %484 : vector<1x128xf32>
      %488 = arith.subf %445, %487 : vector<1x128xf32>
      %489 = math.exp %488 : vector<1x128xf32>
      %490 = arith.subf %458, %487 : vector<1x128xf32>
      %491 = math.exp %490 : vector<1x128xf32>
      %492 = arith.subf %471, %487 : vector<1x128xf32>
      %493 = math.exp %492 : vector<1x128xf32>
      %494 = arith.subf %484, %487 : vector<1x128xf32>
      %495 = math.exp %494 : vector<1x128xf32>
      %496 = arith.addf %489, %491 : vector<1x128xf32>
      %497 = arith.addf %496, %493 : vector<1x128xf32>
      %498 = arith.addf %497, %495 : vector<1x128xf32>
      %499 = vector.extract_strided_slice %14 {offsets = [4, 0], sizes = [1, 128], strides = [1, 1]} : vector<8x128xf32> to vector<1x128xf32>
      %500 = arith.mulf %499, %498 : vector<1x128xf32>
      %cst_87 = arith.constant 0.000000e+00 : f32
      %501 = vector.broadcast %cst_87 : f32 to vector<1x128xf32>
      %cst_88 = arith.constant 0.000000e+00 : f32
      %502 = vector.broadcast %cst_88 : f32 to vector<1x128xf32>
      %503 = arith.addf %501, %489 : vector<1x128xf32>
      %504 = arith.cmpf oge, %500, %503 : vector<1x128xf32>
      %505 = arith.extui %504 : vector<1x128xi1> to vector<1x128xi32>
      %506 = arith.sitofp %505 : vector<1x128xi32> to vector<1x128xf32>
      %507 = arith.addf %502, %506 : vector<1x128xf32>
      %508 = arith.addf %503, %491 : vector<1x128xf32>
      %509 = arith.cmpf oge, %500, %508 : vector<1x128xf32>
      %510 = arith.extui %509 : vector<1x128xi1> to vector<1x128xi32>
      %511 = arith.sitofp %510 : vector<1x128xi32> to vector<1x128xf32>
      %512 = arith.addf %507, %511 : vector<1x128xf32>
      %513 = arith.addf %508, %493 : vector<1x128xf32>
      %514 = arith.cmpf oge, %500, %513 : vector<1x128xf32>
      %515 = arith.extui %514 : vector<1x128xi1> to vector<1x128xi32>
      %516 = arith.sitofp %515 : vector<1x128xi32> to vector<1x128xf32>
      %517 = arith.addf %512, %516 : vector<1x128xf32>
      %518 = arith.addf %513, %495 : vector<1x128xf32>
      %519 = arith.cmpf oge, %500, %518 : vector<1x128xf32>
      %520 = arith.extui %519 : vector<1x128xi1> to vector<1x128xi32>
      %521 = arith.sitofp %520 : vector<1x128xi32> to vector<1x128xf32>
      %522 = arith.addf %517, %521 : vector<1x128xf32>
      %cst_89 = arith.constant 3.000000e+00 : f32
      %523 = vector.broadcast %cst_89 : f32 to vector<1x128xf32>
      %524 = arith.minimumf %522, %523 : vector<1x128xf32>
      %525 = arith.subf %524, %431 : vector<1x128xf32>
      %526 = vector.broadcast %432 : vector<32x1xf32> to vector<32x128xf32>
      %527 = vector.broadcast %525 : vector<1x128xf32> to vector<32x128xf32>
      %528 = arith.mulf %526, %527 : vector<32x128xf32>
      %529 = arith.addf %425, %528 : vector<32x128xf32>
      %c4_i32 = arith.constant 4 : i32
      %530 = vector.broadcast %c4_i32 : i32 to vector<8x128xi32>
      %531 = arith.cmpi eq, %7, %530 : vector<8x128xi32>
      %532 = vector.shape_cast %524 : vector<1x128xf32> to vector<1x128xf32>
      %533 = vector.broadcast %532 : vector<1x128xf32> to vector<8x128xf32>
      %534 = arith.select %531, %533, %430 : vector<8x128xi1>, vector<8x128xf32>
      %535 = vector.extract_strided_slice %534 {offsets = [5, 0], sizes = [1, 128], strides = [1, 1]} : vector<8x128xf32> to vector<1x128xf32>
      %536 = vector.extract_strided_slice %0 {offsets = [0, 5], sizes = [32, 1], strides = [1, 1]} : vector<32x8xf32> to vector<32x1xf32>
      %cst_90 = arith.constant 0.000000e+00 : f32
      %537 = vector.broadcast %cst_90 : f32 to vector<1x128xf32>
      %538 = arith.subf %537, %535 : vector<1x128xf32>
      %539 = vector.broadcast %536 : vector<32x1xf32> to vector<32x128xf32>
      %540 = vector.broadcast %538 : vector<1x128xf32> to vector<32x128xf32>
      %541 = arith.mulf %539, %540 : vector<32x128xf32>
      %542 = arith.addf %529, %541 : vector<32x128xf32>
      %543 = math.tanh %542 : vector<32x128xf32>
      %544 = vector.broadcast %2 : vector<32x1xf32> to vector<32x128xf32>
      %545 = arith.mulf %543, %544 : vector<32x128xf32>
      %cst_91 = arith.constant dense<0.000000e+00> : vector<128xf32>
      %546 = vector.multi_reduction <add>, %545, %cst_91 [0] : vector<32x128xf32> to vector<128xf32>
      %547 = vector.shape_cast %546 : vector<128xf32> to vector<1x128xf32>
      %cst_92 = arith.constant 0.000000e+00 : f32
      %548 = vector.broadcast %cst_92 : f32 to vector<1x128xf32>
      %549 = arith.subf %548, %547 : vector<1x128xf32>
      %cst_93 = arith.constant 1.000000e+00 : f32
      %550 = vector.broadcast %cst_93 : f32 to vector<1x128xf32>
      %551 = arith.subf %550, %535 : vector<1x128xf32>
      %552 = vector.broadcast %536 : vector<32x1xf32> to vector<32x128xf32>
      %553 = vector.broadcast %551 : vector<1x128xf32> to vector<32x128xf32>
      %554 = arith.mulf %552, %553 : vector<32x128xf32>
      %555 = arith.addf %529, %554 : vector<32x128xf32>
      %556 = math.tanh %555 : vector<32x128xf32>
      %557 = vector.broadcast %2 : vector<32x1xf32> to vector<32x128xf32>
      %558 = arith.mulf %556, %557 : vector<32x128xf32>
      %cst_94 = arith.constant dense<0.000000e+00> : vector<128xf32>
      %559 = vector.multi_reduction <add>, %558, %cst_94 [0] : vector<32x128xf32> to vector<128xf32>
      %560 = vector.shape_cast %559 : vector<128xf32> to vector<1x128xf32>
      %cst_95 = arith.constant 0.000000e+00 : f32
      %561 = vector.broadcast %cst_95 : f32 to vector<1x128xf32>
      %562 = arith.subf %561, %560 : vector<1x128xf32>
      %cst_96 = arith.constant 2.000000e+00 : f32
      %563 = vector.broadcast %cst_96 : f32 to vector<1x128xf32>
      %564 = arith.subf %563, %535 : vector<1x128xf32>
      %565 = vector.broadcast %536 : vector<32x1xf32> to vector<32x128xf32>
      %566 = vector.broadcast %564 : vector<1x128xf32> to vector<32x128xf32>
      %567 = arith.mulf %565, %566 : vector<32x128xf32>
      %568 = arith.addf %529, %567 : vector<32x128xf32>
      %569 = math.tanh %568 : vector<32x128xf32>
      %570 = vector.broadcast %2 : vector<32x1xf32> to vector<32x128xf32>
      %571 = arith.mulf %569, %570 : vector<32x128xf32>
      %cst_97 = arith.constant dense<0.000000e+00> : vector<128xf32>
      %572 = vector.multi_reduction <add>, %571, %cst_97 [0] : vector<32x128xf32> to vector<128xf32>
      %573 = vector.shape_cast %572 : vector<128xf32> to vector<1x128xf32>
      %cst_98 = arith.constant 0.000000e+00 : f32
      %574 = vector.broadcast %cst_98 : f32 to vector<1x128xf32>
      %575 = arith.subf %574, %573 : vector<1x128xf32>
      %cst_99 = arith.constant 3.000000e+00 : f32
      %576 = vector.broadcast %cst_99 : f32 to vector<1x128xf32>
      %577 = arith.subf %576, %535 : vector<1x128xf32>
      %578 = vector.broadcast %536 : vector<32x1xf32> to vector<32x128xf32>
      %579 = vector.broadcast %577 : vector<1x128xf32> to vector<32x128xf32>
      %580 = arith.mulf %578, %579 : vector<32x128xf32>
      %581 = arith.addf %529, %580 : vector<32x128xf32>
      %582 = math.tanh %581 : vector<32x128xf32>
      %583 = vector.broadcast %2 : vector<32x1xf32> to vector<32x128xf32>
      %584 = arith.mulf %582, %583 : vector<32x128xf32>
      %cst_100 = arith.constant dense<0.000000e+00> : vector<128xf32>
      %585 = vector.multi_reduction <add>, %584, %cst_100 [0] : vector<32x128xf32> to vector<128xf32>
      %586 = vector.shape_cast %585 : vector<128xf32> to vector<1x128xf32>
      %cst_101 = arith.constant 0.000000e+00 : f32
      %587 = vector.broadcast %cst_101 : f32 to vector<1x128xf32>
      %588 = arith.subf %587, %586 : vector<1x128xf32>
      %589 = arith.maximumf %549, %562 : vector<1x128xf32>
      %590 = arith.maximumf %589, %575 : vector<1x128xf32>
      %591 = arith.maximumf %590, %588 : vector<1x128xf32>
      %592 = arith.subf %549, %591 : vector<1x128xf32>
      %593 = math.exp %592 : vector<1x128xf32>
      %594 = arith.subf %562, %591 : vector<1x128xf32>
      %595 = math.exp %594 : vector<1x128xf32>
      %596 = arith.subf %575, %591 : vector<1x128xf32>
      %597 = math.exp %596 : vector<1x128xf32>
      %598 = arith.subf %588, %591 : vector<1x128xf32>
      %599 = math.exp %598 : vector<1x128xf32>
      %600 = arith.addf %593, %595 : vector<1x128xf32>
      %601 = arith.addf %600, %597 : vector<1x128xf32>
      %602 = arith.addf %601, %599 : vector<1x128xf32>
      %603 = vector.extract_strided_slice %14 {offsets = [5, 0], sizes = [1, 128], strides = [1, 1]} : vector<8x128xf32> to vector<1x128xf32>
      %604 = arith.mulf %603, %602 : vector<1x128xf32>
      %cst_102 = arith.constant 0.000000e+00 : f32
      %605 = vector.broadcast %cst_102 : f32 to vector<1x128xf32>
      %cst_103 = arith.constant 0.000000e+00 : f32
      %606 = vector.broadcast %cst_103 : f32 to vector<1x128xf32>
      %607 = arith.addf %605, %593 : vector<1x128xf32>
      %608 = arith.cmpf oge, %604, %607 : vector<1x128xf32>
      %609 = arith.extui %608 : vector<1x128xi1> to vector<1x128xi32>
      %610 = arith.sitofp %609 : vector<1x128xi32> to vector<1x128xf32>
      %611 = arith.addf %606, %610 : vector<1x128xf32>
      %612 = arith.addf %607, %595 : vector<1x128xf32>
      %613 = arith.cmpf oge, %604, %612 : vector<1x128xf32>
      %614 = arith.extui %613 : vector<1x128xi1> to vector<1x128xi32>
      %615 = arith.sitofp %614 : vector<1x128xi32> to vector<1x128xf32>
      %616 = arith.addf %611, %615 : vector<1x128xf32>
      %617 = arith.addf %612, %597 : vector<1x128xf32>
      %618 = arith.cmpf oge, %604, %617 : vector<1x128xf32>
      %619 = arith.extui %618 : vector<1x128xi1> to vector<1x128xi32>
      %620 = arith.sitofp %619 : vector<1x128xi32> to vector<1x128xf32>
      %621 = arith.addf %616, %620 : vector<1x128xf32>
      %622 = arith.addf %617, %599 : vector<1x128xf32>
      %623 = arith.cmpf oge, %604, %622 : vector<1x128xf32>
      %624 = arith.extui %623 : vector<1x128xi1> to vector<1x128xi32>
      %625 = arith.sitofp %624 : vector<1x128xi32> to vector<1x128xf32>
      %626 = arith.addf %621, %625 : vector<1x128xf32>
      %cst_104 = arith.constant 3.000000e+00 : f32
      %627 = vector.broadcast %cst_104 : f32 to vector<1x128xf32>
      %628 = arith.minimumf %626, %627 : vector<1x128xf32>
      %629 = arith.subf %628, %535 : vector<1x128xf32>
      %630 = vector.broadcast %536 : vector<32x1xf32> to vector<32x128xf32>
      %631 = vector.broadcast %629 : vector<1x128xf32> to vector<32x128xf32>
      %632 = arith.mulf %630, %631 : vector<32x128xf32>
      %633 = arith.addf %529, %632 : vector<32x128xf32>
      %c5_i32 = arith.constant 5 : i32
      %634 = vector.broadcast %c5_i32 : i32 to vector<8x128xi32>
      %635 = arith.cmpi eq, %7, %634 : vector<8x128xi32>
      %636 = vector.shape_cast %628 : vector<1x128xf32> to vector<1x128xf32>
      %637 = vector.broadcast %636 : vector<1x128xf32> to vector<8x128xf32>
      %638 = arith.select %635, %637, %534 : vector<8x128xi1>, vector<8x128xf32>
      %639 = vector.extract_strided_slice %638 {offsets = [6, 0], sizes = [1, 128], strides = [1, 1]} : vector<8x128xf32> to vector<1x128xf32>
      %640 = vector.extract_strided_slice %0 {offsets = [0, 6], sizes = [32, 1], strides = [1, 1]} : vector<32x8xf32> to vector<32x1xf32>
      %cst_105 = arith.constant 0.000000e+00 : f32
      %641 = vector.broadcast %cst_105 : f32 to vector<1x128xf32>
      %642 = arith.subf %641, %639 : vector<1x128xf32>
      %643 = vector.broadcast %640 : vector<32x1xf32> to vector<32x128xf32>
      %644 = vector.broadcast %642 : vector<1x128xf32> to vector<32x128xf32>
      %645 = arith.mulf %643, %644 : vector<32x128xf32>
      %646 = arith.addf %633, %645 : vector<32x128xf32>
      %647 = math.tanh %646 : vector<32x128xf32>
      %648 = vector.broadcast %2 : vector<32x1xf32> to vector<32x128xf32>
      %649 = arith.mulf %647, %648 : vector<32x128xf32>
      %cst_106 = arith.constant dense<0.000000e+00> : vector<128xf32>
      %650 = vector.multi_reduction <add>, %649, %cst_106 [0] : vector<32x128xf32> to vector<128xf32>
      %651 = vector.shape_cast %650 : vector<128xf32> to vector<1x128xf32>
      %cst_107 = arith.constant 0.000000e+00 : f32
      %652 = vector.broadcast %cst_107 : f32 to vector<1x128xf32>
      %653 = arith.subf %652, %651 : vector<1x128xf32>
      %cst_108 = arith.constant 1.000000e+00 : f32
      %654 = vector.broadcast %cst_108 : f32 to vector<1x128xf32>
      %655 = arith.subf %654, %639 : vector<1x128xf32>
      %656 = vector.broadcast %640 : vector<32x1xf32> to vector<32x128xf32>
      %657 = vector.broadcast %655 : vector<1x128xf32> to vector<32x128xf32>
      %658 = arith.mulf %656, %657 : vector<32x128xf32>
      %659 = arith.addf %633, %658 : vector<32x128xf32>
      %660 = math.tanh %659 : vector<32x128xf32>
      %661 = vector.broadcast %2 : vector<32x1xf32> to vector<32x128xf32>
      %662 = arith.mulf %660, %661 : vector<32x128xf32>
      %cst_109 = arith.constant dense<0.000000e+00> : vector<128xf32>
      %663 = vector.multi_reduction <add>, %662, %cst_109 [0] : vector<32x128xf32> to vector<128xf32>
      %664 = vector.shape_cast %663 : vector<128xf32> to vector<1x128xf32>
      %cst_110 = arith.constant 0.000000e+00 : f32
      %665 = vector.broadcast %cst_110 : f32 to vector<1x128xf32>
      %666 = arith.subf %665, %664 : vector<1x128xf32>
      %cst_111 = arith.constant 2.000000e+00 : f32
      %667 = vector.broadcast %cst_111 : f32 to vector<1x128xf32>
      %668 = arith.subf %667, %639 : vector<1x128xf32>
      %669 = vector.broadcast %640 : vector<32x1xf32> to vector<32x128xf32>
      %670 = vector.broadcast %668 : vector<1x128xf32> to vector<32x128xf32>
      %671 = arith.mulf %669, %670 : vector<32x128xf32>
      %672 = arith.addf %633, %671 : vector<32x128xf32>
      %673 = math.tanh %672 : vector<32x128xf32>
      %674 = vector.broadcast %2 : vector<32x1xf32> to vector<32x128xf32>
      %675 = arith.mulf %673, %674 : vector<32x128xf32>
      %cst_112 = arith.constant dense<0.000000e+00> : vector<128xf32>
      %676 = vector.multi_reduction <add>, %675, %cst_112 [0] : vector<32x128xf32> to vector<128xf32>
      %677 = vector.shape_cast %676 : vector<128xf32> to vector<1x128xf32>
      %cst_113 = arith.constant 0.000000e+00 : f32
      %678 = vector.broadcast %cst_113 : f32 to vector<1x128xf32>
      %679 = arith.subf %678, %677 : vector<1x128xf32>
      %cst_114 = arith.constant 3.000000e+00 : f32
      %680 = vector.broadcast %cst_114 : f32 to vector<1x128xf32>
      %681 = arith.subf %680, %639 : vector<1x128xf32>
      %682 = vector.broadcast %640 : vector<32x1xf32> to vector<32x128xf32>
      %683 = vector.broadcast %681 : vector<1x128xf32> to vector<32x128xf32>
      %684 = arith.mulf %682, %683 : vector<32x128xf32>
      %685 = arith.addf %633, %684 : vector<32x128xf32>
      %686 = math.tanh %685 : vector<32x128xf32>
      %687 = vector.broadcast %2 : vector<32x1xf32> to vector<32x128xf32>
      %688 = arith.mulf %686, %687 : vector<32x128xf32>
      %cst_115 = arith.constant dense<0.000000e+00> : vector<128xf32>
      %689 = vector.multi_reduction <add>, %688, %cst_115 [0] : vector<32x128xf32> to vector<128xf32>
      %690 = vector.shape_cast %689 : vector<128xf32> to vector<1x128xf32>
      %cst_116 = arith.constant 0.000000e+00 : f32
      %691 = vector.broadcast %cst_116 : f32 to vector<1x128xf32>
      %692 = arith.subf %691, %690 : vector<1x128xf32>
      %693 = arith.maximumf %653, %666 : vector<1x128xf32>
      %694 = arith.maximumf %693, %679 : vector<1x128xf32>
      %695 = arith.maximumf %694, %692 : vector<1x128xf32>
      %696 = arith.subf %653, %695 : vector<1x128xf32>
      %697 = math.exp %696 : vector<1x128xf32>
      %698 = arith.subf %666, %695 : vector<1x128xf32>
      %699 = math.exp %698 : vector<1x128xf32>
      %700 = arith.subf %679, %695 : vector<1x128xf32>
      %701 = math.exp %700 : vector<1x128xf32>
      %702 = arith.subf %692, %695 : vector<1x128xf32>
      %703 = math.exp %702 : vector<1x128xf32>
      %704 = arith.addf %697, %699 : vector<1x128xf32>
      %705 = arith.addf %704, %701 : vector<1x128xf32>
      %706 = arith.addf %705, %703 : vector<1x128xf32>
      %707 = vector.extract_strided_slice %14 {offsets = [6, 0], sizes = [1, 128], strides = [1, 1]} : vector<8x128xf32> to vector<1x128xf32>
      %708 = arith.mulf %707, %706 : vector<1x128xf32>
      %cst_117 = arith.constant 0.000000e+00 : f32
      %709 = vector.broadcast %cst_117 : f32 to vector<1x128xf32>
      %cst_118 = arith.constant 0.000000e+00 : f32
      %710 = vector.broadcast %cst_118 : f32 to vector<1x128xf32>
      %711 = arith.addf %709, %697 : vector<1x128xf32>
      %712 = arith.cmpf oge, %708, %711 : vector<1x128xf32>
      %713 = arith.extui %712 : vector<1x128xi1> to vector<1x128xi32>
      %714 = arith.sitofp %713 : vector<1x128xi32> to vector<1x128xf32>
      %715 = arith.addf %710, %714 : vector<1x128xf32>
      %716 = arith.addf %711, %699 : vector<1x128xf32>
      %717 = arith.cmpf oge, %708, %716 : vector<1x128xf32>
      %718 = arith.extui %717 : vector<1x128xi1> to vector<1x128xi32>
      %719 = arith.sitofp %718 : vector<1x128xi32> to vector<1x128xf32>
      %720 = arith.addf %715, %719 : vector<1x128xf32>
      %721 = arith.addf %716, %701 : vector<1x128xf32>
      %722 = arith.cmpf oge, %708, %721 : vector<1x128xf32>
      %723 = arith.extui %722 : vector<1x128xi1> to vector<1x128xi32>
      %724 = arith.sitofp %723 : vector<1x128xi32> to vector<1x128xf32>
      %725 = arith.addf %720, %724 : vector<1x128xf32>
      %726 = arith.addf %721, %703 : vector<1x128xf32>
      %727 = arith.cmpf oge, %708, %726 : vector<1x128xf32>
      %728 = arith.extui %727 : vector<1x128xi1> to vector<1x128xi32>
      %729 = arith.sitofp %728 : vector<1x128xi32> to vector<1x128xf32>
      %730 = arith.addf %725, %729 : vector<1x128xf32>
      %cst_119 = arith.constant 3.000000e+00 : f32
      %731 = vector.broadcast %cst_119 : f32 to vector<1x128xf32>
      %732 = arith.minimumf %730, %731 : vector<1x128xf32>
      %733 = arith.subf %732, %639 : vector<1x128xf32>
      %734 = vector.broadcast %640 : vector<32x1xf32> to vector<32x128xf32>
      %735 = vector.broadcast %733 : vector<1x128xf32> to vector<32x128xf32>
      %736 = arith.mulf %734, %735 : vector<32x128xf32>
      %737 = arith.addf %633, %736 : vector<32x128xf32>
      %c6_i32 = arith.constant 6 : i32
      %738 = vector.broadcast %c6_i32 : i32 to vector<8x128xi32>
      %739 = arith.cmpi eq, %7, %738 : vector<8x128xi32>
      %740 = vector.shape_cast %732 : vector<1x128xf32> to vector<1x128xf32>
      %741 = vector.broadcast %740 : vector<1x128xf32> to vector<8x128xf32>
      %742 = arith.select %739, %741, %638 : vector<8x128xi1>, vector<8x128xf32>
      %743 = vector.extract_strided_slice %742 {offsets = [7, 0], sizes = [1, 128], strides = [1, 1]} : vector<8x128xf32> to vector<1x128xf32>
      %744 = vector.extract_strided_slice %0 {offsets = [0, 7], sizes = [32, 1], strides = [1, 1]} : vector<32x8xf32> to vector<32x1xf32>
      %cst_120 = arith.constant 0.000000e+00 : f32
      %745 = vector.broadcast %cst_120 : f32 to vector<1x128xf32>
      %746 = arith.subf %745, %743 : vector<1x128xf32>
      %747 = vector.broadcast %744 : vector<32x1xf32> to vector<32x128xf32>
      %748 = vector.broadcast %746 : vector<1x128xf32> to vector<32x128xf32>
      %749 = arith.mulf %747, %748 : vector<32x128xf32>
      %750 = arith.addf %737, %749 : vector<32x128xf32>
      %751 = math.tanh %750 : vector<32x128xf32>
      %752 = vector.broadcast %2 : vector<32x1xf32> to vector<32x128xf32>
      %753 = arith.mulf %751, %752 : vector<32x128xf32>
      %cst_121 = arith.constant dense<0.000000e+00> : vector<128xf32>
      %754 = vector.multi_reduction <add>, %753, %cst_121 [0] : vector<32x128xf32> to vector<128xf32>
      %755 = vector.shape_cast %754 : vector<128xf32> to vector<1x128xf32>
      %cst_122 = arith.constant 0.000000e+00 : f32
      %756 = vector.broadcast %cst_122 : f32 to vector<1x128xf32>
      %757 = arith.subf %756, %755 : vector<1x128xf32>
      %cst_123 = arith.constant 1.000000e+00 : f32
      %758 = vector.broadcast %cst_123 : f32 to vector<1x128xf32>
      %759 = arith.subf %758, %743 : vector<1x128xf32>
      %760 = vector.broadcast %744 : vector<32x1xf32> to vector<32x128xf32>
      %761 = vector.broadcast %759 : vector<1x128xf32> to vector<32x128xf32>
      %762 = arith.mulf %760, %761 : vector<32x128xf32>
      %763 = arith.addf %737, %762 : vector<32x128xf32>
      %764 = math.tanh %763 : vector<32x128xf32>
      %765 = vector.broadcast %2 : vector<32x1xf32> to vector<32x128xf32>
      %766 = arith.mulf %764, %765 : vector<32x128xf32>
      %cst_124 = arith.constant dense<0.000000e+00> : vector<128xf32>
      %767 = vector.multi_reduction <add>, %766, %cst_124 [0] : vector<32x128xf32> to vector<128xf32>
      %768 = vector.shape_cast %767 : vector<128xf32> to vector<1x128xf32>
      %cst_125 = arith.constant 0.000000e+00 : f32
      %769 = vector.broadcast %cst_125 : f32 to vector<1x128xf32>
      %770 = arith.subf %769, %768 : vector<1x128xf32>
      %cst_126 = arith.constant 2.000000e+00 : f32
      %771 = vector.broadcast %cst_126 : f32 to vector<1x128xf32>
      %772 = arith.subf %771, %743 : vector<1x128xf32>
      %773 = vector.broadcast %744 : vector<32x1xf32> to vector<32x128xf32>
      %774 = vector.broadcast %772 : vector<1x128xf32> to vector<32x128xf32>
      %775 = arith.mulf %773, %774 : vector<32x128xf32>
      %776 = arith.addf %737, %775 : vector<32x128xf32>
      %777 = math.tanh %776 : vector<32x128xf32>
      %778 = vector.broadcast %2 : vector<32x1xf32> to vector<32x128xf32>
      %779 = arith.mulf %777, %778 : vector<32x128xf32>
      %cst_127 = arith.constant dense<0.000000e+00> : vector<128xf32>
      %780 = vector.multi_reduction <add>, %779, %cst_127 [0] : vector<32x128xf32> to vector<128xf32>
      %781 = vector.shape_cast %780 : vector<128xf32> to vector<1x128xf32>
      %cst_128 = arith.constant 0.000000e+00 : f32
      %782 = vector.broadcast %cst_128 : f32 to vector<1x128xf32>
      %783 = arith.subf %782, %781 : vector<1x128xf32>
      %cst_129 = arith.constant 3.000000e+00 : f32
      %784 = vector.broadcast %cst_129 : f32 to vector<1x128xf32>
      %785 = arith.subf %784, %743 : vector<1x128xf32>
      %786 = vector.broadcast %744 : vector<32x1xf32> to vector<32x128xf32>
      %787 = vector.broadcast %785 : vector<1x128xf32> to vector<32x128xf32>
      %788 = arith.mulf %786, %787 : vector<32x128xf32>
      %789 = arith.addf %737, %788 : vector<32x128xf32>
      %790 = math.tanh %789 : vector<32x128xf32>
      %791 = vector.broadcast %2 : vector<32x1xf32> to vector<32x128xf32>
      %792 = arith.mulf %790, %791 : vector<32x128xf32>
      %cst_130 = arith.constant dense<0.000000e+00> : vector<128xf32>
      %793 = vector.multi_reduction <add>, %792, %cst_130 [0] : vector<32x128xf32> to vector<128xf32>
      %794 = vector.shape_cast %793 : vector<128xf32> to vector<1x128xf32>
      %cst_131 = arith.constant 0.000000e+00 : f32
      %795 = vector.broadcast %cst_131 : f32 to vector<1x128xf32>
      %796 = arith.subf %795, %794 : vector<1x128xf32>
      %797 = arith.maximumf %757, %770 : vector<1x128xf32>
      %798 = arith.maximumf %797, %783 : vector<1x128xf32>
      %799 = arith.maximumf %798, %796 : vector<1x128xf32>
      %800 = arith.subf %757, %799 : vector<1x128xf32>
      %801 = math.exp %800 : vector<1x128xf32>
      %802 = arith.subf %770, %799 : vector<1x128xf32>
      %803 = math.exp %802 : vector<1x128xf32>
      %804 = arith.subf %783, %799 : vector<1x128xf32>
      %805 = math.exp %804 : vector<1x128xf32>
      %806 = arith.subf %796, %799 : vector<1x128xf32>
      %807 = math.exp %806 : vector<1x128xf32>
      %808 = arith.addf %801, %803 : vector<1x128xf32>
      %809 = arith.addf %808, %805 : vector<1x128xf32>
      %810 = arith.addf %809, %807 : vector<1x128xf32>
      %811 = vector.extract_strided_slice %14 {offsets = [7, 0], sizes = [1, 128], strides = [1, 1]} : vector<8x128xf32> to vector<1x128xf32>
      %812 = arith.mulf %811, %810 : vector<1x128xf32>
      %cst_132 = arith.constant 0.000000e+00 : f32
      %813 = vector.broadcast %cst_132 : f32 to vector<1x128xf32>
      %cst_133 = arith.constant 0.000000e+00 : f32
      %814 = vector.broadcast %cst_133 : f32 to vector<1x128xf32>
      %815 = arith.addf %813, %801 : vector<1x128xf32>
      %816 = arith.cmpf oge, %812, %815 : vector<1x128xf32>
      %817 = arith.extui %816 : vector<1x128xi1> to vector<1x128xi32>
      %818 = arith.sitofp %817 : vector<1x128xi32> to vector<1x128xf32>
      %819 = arith.addf %814, %818 : vector<1x128xf32>
      %820 = arith.addf %815, %803 : vector<1x128xf32>
      %821 = arith.cmpf oge, %812, %820 : vector<1x128xf32>
      %822 = arith.extui %821 : vector<1x128xi1> to vector<1x128xi32>
      %823 = arith.sitofp %822 : vector<1x128xi32> to vector<1x128xf32>
      %824 = arith.addf %819, %823 : vector<1x128xf32>
      %825 = arith.addf %820, %805 : vector<1x128xf32>
      %826 = arith.cmpf oge, %812, %825 : vector<1x128xf32>
      %827 = arith.extui %826 : vector<1x128xi1> to vector<1x128xi32>
      %828 = arith.sitofp %827 : vector<1x128xi32> to vector<1x128xf32>
      %829 = arith.addf %824, %828 : vector<1x128xf32>
      %830 = arith.addf %825, %807 : vector<1x128xf32>
      %831 = arith.cmpf oge, %812, %830 : vector<1x128xf32>
      %832 = arith.extui %831 : vector<1x128xi1> to vector<1x128xi32>
      %833 = arith.sitofp %832 : vector<1x128xi32> to vector<1x128xf32>
      %834 = arith.addf %829, %833 : vector<1x128xf32>
      %cst_134 = arith.constant 3.000000e+00 : f32
      %835 = vector.broadcast %cst_134 : f32 to vector<1x128xf32>
      %836 = arith.minimumf %834, %835 : vector<1x128xf32>
      %837 = arith.subf %836, %743 : vector<1x128xf32>
      %838 = vector.broadcast %744 : vector<32x1xf32> to vector<32x128xf32>
      %839 = vector.broadcast %837 : vector<1x128xf32> to vector<32x128xf32>
      %840 = arith.mulf %838, %839 : vector<32x128xf32>
      %841 = arith.addf %737, %840 : vector<32x128xf32>
      %c7_i32 = arith.constant 7 : i32
      %842 = vector.broadcast %c7_i32 : i32 to vector<8x128xi32>
      %843 = arith.cmpi eq, %7, %842 : vector<8x128xi32>
      %844 = vector.shape_cast %836 : vector<1x128xf32> to vector<1x128xf32>
      %845 = vector.broadcast %844 : vector<1x128xf32> to vector<8x128xf32>
      %846 = arith.select %843, %845, %742 : vector<8x128xi1>, vector<8x128xf32>
      scf.yield %846, %841 : vector<8x128xf32>, vector<32x128xf32>
    }
    %c2_i32_7 = arith.constant 2 : i32
    %10 = arith.fptosi %9#0 : vector<8x128xf32> to vector<8x128xi32>
    %c0_8 = arith.constant 0 : index
    %c0_9 = arith.constant 0 : index
    %11 = vector.load %arg6[%c0_8, %c0_9] : memref<8x128xi32, #tpu.memory_space<vmem>>, vector<8x128xi32>
    tpu.vector_store %arg6[%c0_8, %c0_9], %10 {strides = array<i32>} : memref<8x128xi32, #tpu.memory_space<vmem>>, vector<8x128xi32>,
    return
  }
  func.func @transform_0(%arg0: i32) -> (i32, i32) {
    %c0_i32 = arith.constant 0 : i32
    %c0_i32_0 = arith.constant 0 : i32
    return %c0_i32, %arg0 : i32, i32
  }
  func.func @transform_1(%arg0: i32) -> (i32, i32) {
    %c0_i32 = arith.constant 0 : i32
    %c0_i32_0 = arith.constant 0 : i32
    %c0_i32_1 = arith.constant 0 : i32
    return %c0_i32, %c0_i32_0 : i32, i32
  }
  func.func @transform_2(%arg0: i32) -> (i32, i32) {
    %c0_i32 = arith.constant 0 : i32
    %c0_i32_0 = arith.constant 0 : i32
    %c0_i32_1 = arith.constant 0 : i32
    return %c0_i32, %c0_i32_0 : i32, i32
  }
  func.func @transform_3(%arg0: i32) -> (i32, i32) {
    %c0_i32 = arith.constant 0 : i32
    %c0_i32_0 = arith.constant 0 : i32
    %c0_i32_1 = arith.constant 0 : i32
    return %c0_i32, %c0_i32_0 : i32, i32
  }
  func.func @transform_4(%arg0: i32) -> (i32, i32, i32) {
    %c0_i32 = arith.constant 0 : i32
    %c0_i32_0 = arith.constant 0 : i32
    %c0_i32_1 = arith.constant 0 : i32
    return %c0_i32, %c0_i32_0, %arg0 : i32, i32, i32
  }
  func.func @transform_5(%arg0: i32) -> (i32, i32) {
    %c0_i32 = arith.constant 0 : i32
    %c0_i32_0 = arith.constant 0 : i32
    return %c0_i32, %arg0 : i32, i32
  }
}

</mosaic_0001>

<llo_original>
// kernel: tpu_custom_call.1
$region0: #{tpu_custom_call.1}
  #allocation0 [shape = 'u32[]', space=smem, size = 0x4, offset = 0x4, fixed_abs, tag = 'smem constant byte address 0x4 - core index']
  #allocation1 [shape = 'u32[144,128]{1,0:T(1,128)}', space=vmem, size = 0x12000, scoped, tag = 'internal scratch']
  %s0 = inlined_call_operand.vmem [shape: f32[8,128], index: 0, kind: input, shape index: {}]
  %s1 = inlined_call_operand.vmem [shape: f32[32,8], index: 1, kind: input, shape index: {}]
  %s2 = inlined_call_operand.vmem [shape: f32[32,1], index: 2, kind: input, shape index: {}]
  %s3 = inlined_call_operand.vmem [shape: f32[32,1], index: 3, kind: input, shape index: {}]
  %s4 = inlined_call_operand.vmem [shape: f32[2,8,128], index: 4, kind: input, shape index: {}]
  %s5 = inlined_call_operand.hbm [shape: s32[8,128], index: 5, kind: output, shape index: {}]
  %s6 = sld [smem:[#allocation0]]
  $region37: #{tpu_custom_call.1} parent=0
    _
  %s8 = ssub.s32 1, %s6
  %s9 = scalar_select 0, %s8, %s6
  $region1: #{tpu_custom_call.1} parent=0
    #allocation2 [shape = 'u8[4096]{0}', space=vmem, size = 0x1000, scoped, tag = 'output window, operand 0, single buffered']
    #allocation3 [shape = 's32[1]{0}', space=sflag, size = 0x4, scoped, tag = 'scoped memory for tpu_custom_call.1']
    %10 = vsyncpa [#allocation3], 0
    // Predicated region
    $region2: #{tpu_custom_call.1} parent=1 // pred_check
      _
    $region3: #{tpu_custom_call.1} parent=1 // pred_check_branch
      %12 = sbr.rel (0) target = $region5
    $region4: #{tpu_custom_call.1} parent=1 // pred_region
      _
    $region5: #{tpu_custom_call.1} parent=1 // pred_fallthru
      _
    // Predicated region
    $region6: #{tpu_custom_call.1} parent=1 // pred_check
      _
    $region7: #{tpu_custom_call.1} parent=1 // pred_check_branch
      %14 = sbr.rel (0) target = $region9
    $region8: #{tpu_custom_call.1} parent=1 // pred_region
      _
    $region9: #{tpu_custom_call.1} parent=1 // pred_fallthru
      _
    // Predicated region
    $region10: #{tpu_custom_call.1} parent=1 // pred_check
      _
    $region11: #{tpu_custom_call.1} parent=1 // pred_check_branch
      %16 = sbr.rel (0) target = $region13
    $region12: #{tpu_custom_call.1} parent=1 // pred_region
      _
    $region13: #{tpu_custom_call.1} parent=1 // pred_fallthru
      _
    // Predicated region
    $region14: #{tpu_custom_call.1} parent=1 // pred_check
      _
    $region15: #{tpu_custom_call.1} parent=1 // pred_check_branch
      %18 = sbr.rel (0) target = $region17
    $region16: #{tpu_custom_call.1} parent=1 // pred_region
      _
    $region17: #{tpu_custom_call.1} parent=1 // pred_fallthru
      _
    // Predicated region
    $region18: #{tpu_custom_call.1} parent=1 // pred_check
      _
    $region19: #{tpu_custom_call.1} parent=1 // pred_check_branch
      %20 = sbr.rel (0) target = $region21
    $region20: #{tpu_custom_call.1} parent=1 // pred_region
      _
    $region21: #{tpu_custom_call.1} parent=1 // pred_fallthru
      _
    %v21 = vld [vmem:[%s1] sm:$0xff]
    %v22 = vld [vmem:[%s1 + $0x8] sm:$0xff]
    %v23 = vld [vmem:[%s1 + $0x10] sm:$0xff]
    %v24 = vld [vmem:[%s1 + $0x18] sm:$0xff]
    %v25 = vld [vmem:[%s2] sm:$0xff]
    %v26 = vld [vmem:[%s2 + $0x8] sm:$0xff]
    %v27 = vld [vmem:[%s2 + $0x10] sm:$0xff]
    %v28 = vld [vmem:[%s2 + $0x18] sm:$0xff]
    %v29 = vld [vmem:[%s3] sm:$0xff]
    %v30 = vld [vmem:[%s3 + $0x8] sm:$0xff]
    %v31 = vld [vmem:[%s3 + $0x10] sm:$0xff]
    %v32 = vld [vmem:[%s3 + $0x18] sm:$0xff]
    %v33 = vld [vmem:[%s0] sm:$0xff]
    %35 = vset.pattern.permute.xlu0 0
    %36 = vperm.xlu0 %35, %v25
    %v37 = vpop.permute.xlu0 %36
    %40 = vset.pattern.permute.xlu0 0
    %41 = vperm.xlu0 %40, %v26
    %v42 = vpop.permute.xlu0 %41
    %45 = vset.pattern.permute.xlu0 0
    %46 = vperm.xlu0 %45, %v27
    %v47 = vpop.permute.xlu0 %46
    %50 = vset.pattern.permute.xlu0 0
    %51 = vperm.xlu0 %50, %v28
    %v52 = vpop.permute.xlu0 %51
    %vm54 = vcmask 64512
    %v56 = vsel %vm54, %v21, 0
    %v59 = vsel %vm54, %v22, 0
    %v62 = vsel %vm54, %v23, 0
    %v65 = vsel %vm54, %v24, 0
    %67 = vmatprep.subr.mxu0 0.0
    %68 = vmatpush1.msra.mxu0 %v33
    %69 = vmatprep.subr.mxu0 0.0
    %70 = vmatpush1.msra.mxu0 0.0
    %71 = vmatprep.subr.mxu0 0.0
    %72 = vmatpush1.msra.mxu0 0.0
    %73 = vmatprep.subr.mxu0 0.0
    %74 = vmatpush1.msra.mxu0 0.0
    %75 = vmatprep.subr.mxu0 0.0
    %76 = vmatpush1.msra.mxu0 0.0
    %77 = vmatprep.subr.mxu0 0.0
    %78 = vmatpush1.msra.mxu0 0.0
    %79 = vmatprep.subr.mxu0 0.0
    %80 = vmatpush1.msra.mxu0 0.0
    %81 = vmatprep.subr.mxu0 0.0
    %82 = vmatpush1.msra.mxu0 0.0
    %83 = vmatprep.subr.mxu0 0.0
    %84 = vmatpush1.msra.mxu0 0.0
    %85 = vmatprep.subr.mxu0 0.0
    %86 = vmatpush1.msra.mxu0 0.0
    %87 = vmatprep.subr.mxu0 0.0
    %88 = vmatpush1.msra.mxu0 0.0
    %89 = vmatprep.subr.mxu0 0.0
    %90 = vmatpush1.msra.mxu0 0.0
    %91 = vmatprep.subr.mxu0 0.0
    %92 = vmatpush1.msra.mxu0 0.0
    %93 = vmatprep.subr.mxu0 0.0
    %94 = vmatpush1.msra.mxu0 0.0
    %95 = vmatprep.subr.mxu0 0.0
    %96 = vmatpush1.msra.mxu0 0.0
    %97 = vmatprep.subr.mxu0 0.0
    %98 = vmatpush1.msra.mxu0 0.0
    %99 = vmatprep.subr.mxu0 0.0
    %100 = vmatpush1.msra.mxu0 0.0
    %101 = vmatprep.subr.mxu0 0.0
    %102 = vmatpush1.msra.mxu0 0.0
    %103 = vmatprep.subr.mxu0 0.0
    %104 = vmatpush1.msra.mxu0 0.0
    %105 = vmatprep.subr.mxu0 0.0
    %106 = vmatpush1.msra.mxu0 0.0
    %107 = vmatprep.subr.mxu0 0.0
    %108 = vmatpush1.msra.mxu0 0.0
    %109 = vmatprep.subr.mxu0 0.0
    %110 = vmatpush1.msra.mxu0 0.0
    %111 = vmatprep.subr.mxu0 0.0
    %112 = vmatpush1.msra.mxu0 0.0
    %113 = vmatprep.subr.mxu0 0.0
    %114 = vmatpush1.msra.mxu0 0.0
    %115 = vmatprep.subr.mxu0 0.0
    %116 = vmatpush1.msra.mxu0 0.0
    %117 = vmatprep.subr.mxu0 0.0
    %118 = vmatpush1.msra.mxu0 0.0
    %119 = vmatprep.subr.mxu0 0.0
    %120 = vmatpush1.msra.mxu0 0.0
    %121 = vmatprep.subr.mxu0 0.0
    %122 = vmatpush1.msra.mxu0 0.0
    %123 = vmatprep.subr.mxu0 0.0
    %124 = vmatpush1.msra.mxu0 0.0
    %125 = vmatprep.subr.mxu0 0.0
    %126 = vmatpush1.msra.mxu0 0.0
    %127 = vmatprep.subr.mxu0 0.0
    %128 = vmatpush1.msra.mxu0 0.0
    %129 = vmatprep.subr.mxu0 0.0
    %130 = vmatpush1.msra.mxu0 0.0
    %131 = vmatprep.mubr.f32.mxu0 0.0
    %132 = vmatmul.mubr.f32.gmra.mrb[0].mxu0 %v56
    %v133 = vpop.f32.mrb[0].mxu0
    %v134 = vadd.f32 %v37, %v133
    %v135 = vpop.f32.mrb[0].mxu0
    %136 = vmatprep.mubr.f32.mxu0 0.0
    %137 = vmatmul.mubr.f32.gmra.mrb[0].mxu0 %v59
    %v138 = vpop.f32.mrb[0].mxu0
    %v139 = vadd.f32 %v42, %v138
    %v140 = vpop.f32.mrb[0].mxu0
    %141 = vmatprep.mubr.f32.mxu0 0.0
    %142 = vmatmul.mubr.f32.gmra.mrb[0].mxu0 %v62
    %v143 = vpop.f32.mrb[0].mxu0
    %v144 = vadd.f32 %v47, %v143
    %v145 = vpop.f32.mrb[0].mxu0
    %146 = vmatprep.mubr.f32.mxu0 0.0
    %147 = vmatmul.mubr.f32.gmra.mrb[0].mxu0 %v65
    %v148 = vpop.f32.mrb[0].mxu0
    %v149 = vadd.f32 %v52, %v148
    %v150 = vpop.f32.mrb[0].mxu0
    %151 = vdwg.mxu0
    %v152 = vlaneseq
    %v153 = vshrl.u32 %v152, 7
    loop: start=0, step=1, limit=2
    $region22: #{tpu_custom_call.1} parent=1 // loop_pre_header
      _
    $region23: #{tpu_custom_call.1} parent=1 // loop_header
      %s155 = sphi 0, %s159
      %p156 = scmp.ge.s32.totalorder %s155, 2
      %v160 = vphi %v33, %v1779
      %v161 = vphi %v134, %v1770
      %v162 = vphi %v139, %v1771
      %v163 = vphi %v144, %v1772
      %v164 = vphi %v149, %v1773
    $region24: #{tpu_custom_call.1} parent=1 // loop_header_branch
      %158 = sbr.rel (%p156) target = $region28
    $region25: #{tpu_custom_call.1} parent=1 // loop_body
      %s165 = smul.u32 %s155, 8
      %s166 = scalar_lea.vmem %s4, %s165
      %v167 = vld [vmem:[%s166] sm:$0xff]
      %v168 = vsub.f32 0.0, %v160
      %169 = vset.pattern.permute.xlu0 0
      %170 = vperm.xlu0 %169, %v21
      %v171 = vpop.permute.xlu0 %170
      %173 = vset.pattern.permute.xlu0 0
      %174 = vperm.xlu0 %173, %v22
      %v175 = vpop.permute.xlu0 %174
      %177 = vset.pattern.permute.xlu0 0
      %178 = vperm.xlu0 %177, %v23
      %v179 = vpop.permute.xlu0 %178
      %181 = vset.pattern.permute.xlu0 0
      %182 = vperm.xlu0 %181, %v24
      %v183 = vpop.permute.xlu0 %182
      %v185 = vlaneseq
      %v186 = vshrl.u32 %v185, 7
      %v187 = vsub.s32 0, %v186
      %v188 = vrot.slane %v168, %v187
      %v189 = vmul.f32 %v171, %v188
      %v190 = vmul.f32 %v175, %v188
      %v191 = vmul.f32 %v179, %v188
      %v192 = vmul.f32 %v183, %v188
      %v193 = vadd.f32 %v161, %v189
      %v194 = vadd.f32 %v162, %v190
      %v195 = vadd.f32 %v163, %v191
      %v196 = vadd.f32 %v164, %v192
      %v197 = vtanh.pop %v193
      %v198 = vtanh.pop %v194
      %v199 = vtanh.pop %v195
      %v200 = vtanh.pop %v196
      %202 = vset.pattern.permute.xlu0 0
      %203 = vperm.xlu0 %202, %v29
      %v204 = vpop.permute.xlu0 %203
      %207 = vset.pattern.permute.xlu0 0
      %208 = vperm.xlu0 %207, %v30
      %v209 = vpop.permute.xlu0 %208
      %212 = vset.pattern.permute.xlu0 0
      %213 = vperm.xlu0 %212, %v31
      %v214 = vpop.permute.xlu0 %213
      %217 = vset.pattern.permute.xlu0 0
      %218 = vperm.xlu0 %217, %v32
      %v219 = vpop.permute.xlu0 %218
      %v221 = vmul.f32 %v197, %v204
      %v222 = vmul.f32 %v198, %v209
      %v223 = vmul.f32 %v199, %v214
      %v224 = vmul.f32 %v200, %v219
      %v225 = vadd.f32 %v221, %v222
      %v226 = vadd.f32 %v225, %v223
      %v227 = vadd.f32 %v226, %v224
      %v228 = vrot.slane %v227, 4
      %v229 = vadd.f32 %v227, %v228
      %v230 = vrot.slane %v229, 2
      %v231 = vadd.f32 %v229, %v230
      %v232 = vrot.slane %v231, 1
      %v233 = vadd.f32 %v231, %v232
      %v234 = vsub.f32 0.0, %v233
      %v235 = vsub.f32 1.0, %v160
      %v236 = vlaneseq
      %v237 = vshrl.u32 %v236, 7
      %v238 = vsub.s32 0, %v237
      %v239 = vrot.slane %v235, %v238
      %v240 = vmul.f32 %v171, %v239
      %v241 = vmul.f32 %v175, %v239
      %v242 = vmul.f32 %v179, %v239
      %v243 = vmul.f32 %v183, %v239
      %v244 = vadd.f32 %v161, %v240
      %v245 = vadd.f32 %v162, %v241
      %v246 = vadd.f32 %v163, %v242
      %v247 = vadd.f32 %v164, %v243
      %v248 = vtanh.pop %v244
      %v249 = vtanh.pop %v245
      %v250 = vtanh.pop %v246
      %v251 = vtanh.pop %v247
      %v252 = vmul.f32 %v248, %v204
      %v253 = vmul.f32 %v249, %v209
      %v254 = vmul.f32 %v250, %v214
      %v255 = vmul.f32 %v251, %v219
      %v256 = vadd.f32 %v252, %v253
      %v257 = vadd.f32 %v256, %v254
      %v258 = vadd.f32 %v257, %v255
      %v259 = vrot.slane %v258, 4
      %v260 = vadd.f32 %v258, %v259
      %v261 = vrot.slane %v260, 2
      %v262 = vadd.f32 %v260, %v261
      %v263 = vrot.slane %v262, 1
      %v264 = vadd.f32 %v262, %v263
      %v265 = vsub.f32 0.0, %v264
      %v266 = vsub.f32 2.0, %v160
      %v267 = vlaneseq
      %v268 = vshrl.u32 %v267, 7
      %v269 = vsub.s32 0, %v268
      %v270 = vrot.slane %v266, %v269
      %v271 = vmul.f32 %v171, %v270
      %v272 = vmul.f32 %v175, %v270
      %v273 = vmul.f32 %v179, %v270
      %v274 = vmul.f32 %v183, %v270
      %v275 = vadd.f32 %v161, %v271
      %v276 = vadd.f32 %v162, %v272
      %v277 = vadd.f32 %v163, %v273
      %v278 = vadd.f32 %v164, %v274
      %v279 = vtanh.pop %v275
      %v280 = vtanh.pop %v276
      %v281 = vtanh.pop %v277
      %v282 = vtanh.pop %v278
      %v283 = vmul.f32 %v279, %v204
      %v284 = vmul.f32 %v280, %v209
      %v285 = vmul.f32 %v281, %v214
      %v286 = vmul.f32 %v282, %v219
      %v287 = vadd.f32 %v283, %v284
      %v288 = vadd.f32 %v287, %v285
      %v289 = vadd.f32 %v288, %v286
      %v290 = vrot.slane %v289, 4
      %v291 = vadd.f32 %v289, %v290
      %v292 = vrot.slane %v291, 2
      %v293 = vadd.f32 %v291, %v292
      %v294 = vrot.slane %v293, 1
      %v295 = vadd.f32 %v293, %v294
      %v296 = vsub.f32 0.0, %v295
      %v297 = vsub.f32 3.0, %v160
      %v298 = vlaneseq
      %v299 = vshrl.u32 %v298, 7
      %v300 = vsub.s32 0, %v299
      %v301 = vrot.slane %v297, %v300
      %v302 = vmul.f32 %v171, %v301
      %v303 = vmul.f32 %v175, %v301
      %v304 = vmul.f32 %v179, %v301
      %v305 = vmul.f32 %v183, %v301
      %v306 = vadd.f32 %v161, %v302
      %v307 = vadd.f32 %v162, %v303
      %v308 = vadd.f32 %v163, %v304
      %v309 = vadd.f32 %v164, %v305
      %v310 = vtanh.pop %v306
      %v311 = vtanh.pop %v307
      %v312 = vtanh.pop %v308
      %v313 = vtanh.pop %v309
      %v314 = vmul.f32 %v310, %v204
      %v315 = vmul.f32 %v311, %v209
      %v316 = vmul.f32 %v312, %v214
      %v317 = vmul.f32 %v313, %v219
      %v318 = vadd.f32 %v314, %v315
      %v319 = vadd.f32 %v318, %v316
      %v320 = vadd.f32 %v319, %v317
      %v321 = vrot.slane %v320, 4
      %v322 = vadd.f32 %v320, %v321
      %v323 = vrot.slane %v322, 2
      %v324 = vadd.f32 %v322, %v323
      %v325 = vrot.slane %v324, 1
      %v326 = vadd.f32 %v324, %v325
      %v327 = vsub.f32 0.0, %v326
      %v328 = vmax.f32 %v234, %v265
      %v329 = vmax.f32 %v328, %v296
      %v330 = vmax.f32 %v329, %v327
      %v331 = vsub.f32 %v234, %v330
      %v332 = vmul.f32 %v331, 1.442695
      %v333 = vpow.pop %v332
      %v334 = vsub.f32 %v265, %v330
      %v335 = vmul.f32 %v334, 1.442695
      %v336 = vpow.pop %v335
      %v337 = vsub.f32 %v296, %v330
      %v338 = vmul.f32 %v337, 1.442695
      %v339 = vpow.pop %v338
      %v340 = vsub.f32 %v327, %v330
      %v341 = vmul.f32 %v340, 1.442695
      %v342 = vpow.pop %v341
      %v343 = vadd.f32 %v333, %v336
      %v344 = vadd.f32 %v343, %v339
      %v345 = vadd.f32 %v344, %v342
      %v346 = vmul.f32 %v167, %v345
      %v347 = vadd.f32 %v333, 0.0
      %vm348 = vcmp.ge.f32.partialorder %v346, %v347
      %v349 = vsel %vm348, 1, 0
      %v350 = vcvt.s32.f32 %v349
      %v351 = vadd.f32 %v350, 0.0
      %v352 = vadd.f32 %v347, %v336
      %vm353 = vcmp.ge.f32.partialorder %v346, %v352
      %v354 = vsel %vm353, 1, 0
      %v355 = vcvt.s32.f32 %v354
      %v356 = vadd.f32 %v351, %v355
      %v357 = vadd.f32 %v352, %v339
      %vm358 = vcmp.ge.f32.partialorder %v346, %v357
      %v359 = vsel %vm358, 1, 0
      %v360 = vcvt.s32.f32 %v359
      %v361 = vadd.f32 %v356, %v360
      %v362 = vadd.f32 %v357, %v342
      %vm363 = vcmp.ge.f32.partialorder %v346, %v362
      %v364 = vsel %vm363, 1, 0
      %v365 = vcvt.s32.f32 %v364
      %v366 = vadd.f32 %v361, %v365
      %v367 = vmin.f32 %v366, 3.0
      %v368 = vsub.f32 %v367, %v160
      %v369 = vlaneseq
      %v370 = vshrl.u32 %v369, 7
      %v371 = vsub.s32 0, %v370
      %v372 = vrot.slane %v368, %v371
      %v373 = vmul.f32 %v171, %v372
      %v374 = vmul.f32 %v175, %v372
      %v375 = vmul.f32 %v179, %v372
      %v376 = vmul.f32 %v183, %v372
      %v377 = vadd.f32 %v161, %v373
      %v378 = vadd.f32 %v162, %v374
      %v379 = vadd.f32 %v163, %v375
      %v380 = vadd.f32 %v164, %v376
      %vm381 = vcmp.eq.s32.totalorder %v153, 0
      %v382 = vlaneseq
      %v383 = vshrl.u32 %v382, 7
      %v384 = vsub.s32 0, %v383
      %v385 = vrot.slane %v367, %v384
      %v386 = vsel %vm381, %v385, %v160
      %v387 = vsub.f32 0.0, %v386
      %388 = vset.pattern.permute.xlu0 1
      %389 = vperm.xlu0 %388, %v21
      %v390 = vpop.permute.xlu0 %389
      %392 = vset.pattern.permute.xlu0 1
      %393 = vperm.xlu0 %392, %v22
      %v394 = vpop.permute.xlu0 %393
      %396 = vset.pattern.permute.xlu0 1
      %397 = vperm.xlu0 %396, %v23
      %v398 = vpop.permute.xlu0 %397
      %400 = vset.pattern.permute.xlu0 1
      %401 = vperm.xlu0 %400, %v24
      %v402 = vpop.permute.xlu0 %401
      %v404 = vlaneseq
      %v405 = vshrl.u32 %v404, 7
      %v406 = vsub.s32 1, %v405
      %v407 = vrot.slane %v387, %v406
      %v408 = vmul.f32 %v390, %v407
      %v409 = vmul.f32 %v394, %v407
      %v410 = vmul.f32 %v398, %v407
      %v411 = vmul.f32 %v402, %v407
      %v412 = vadd.f32 %v377, %v408
      %v413 = vadd.f32 %v378, %v409
      %v414 = vadd.f32 %v379, %v410
      %v415 = vadd.f32 %v380, %v411
      %v416 = vtanh.pop %v412
      %v417 = vtanh.pop %v413
      %v418 = vtanh.pop %v414
      %v419 = vtanh.pop %v415
      %v420 = vmul.f32 %v416, %v204
      %v421 = vmul.f32 %v417, %v209
      %v422 = vmul.f32 %v418, %v214
      %v423 = vmul.f32 %v419, %v219
      %v424 = vadd.f32 %v420, %v421
      %v425 = vadd.f32 %v424, %v422
      %v426 = vadd.f32 %v425, %v423
      %v427 = vrot.slane %v426, 4
      %v428 = vadd.f32 %v426, %v427
      %v429 = vrot.slane %v428, 2
      %v430 = vadd.f32 %v428, %v429
      %v431 = vrot.slane %v430, 1
      %v432 = vadd.f32 %v430, %v431
      %v433 = vsub.f32 0.0, %v432
      %v434 = vsub.f32 1.0, %v386
      %v435 = vlaneseq
      %v436 = vshrl.u32 %v435, 7
      %v437 = vsub.s32 1, %v436
      %v438 = vrot.slane %v434, %v437
      %v439 = vmul.f32 %v390, %v438
      %v440 = vmul.f32 %v394, %v438
      %v441 = vmul.f32 %v398, %v438
      %v442 = vmul.f32 %v402, %v438
      %v443 = vadd.f32 %v377, %v439
      %v444 = vadd.f32 %v378, %v440
      %v445 = vadd.f32 %v379, %v441
      %v446 = vadd.f32 %v380, %v442
      %v447 = vtanh.pop %v443
      %v448 = vtanh.pop %v444
      %v449 = vtanh.pop %v445
      %v450 = vtanh.pop %v446
      %v451 = vmul.f32 %v447, %v204
      %v452 = vmul.f32 %v448, %v209
      %v453 = vmul.f32 %v449, %v214
      %v454 = vmul.f32 %v450, %v219
      %v455 = vadd.f32 %v451, %v452
      %v456 = vadd.f32 %v455, %v453
      %v457 = vadd.f32 %v456, %v454
      %v458 = vrot.slane %v457, 4
      %v459 = vadd.f32 %v457, %v458
      %v460 = vrot.slane %v459, 2
      %v461 = vadd.f32 %v459, %v460
      %v462 = vrot.slane %v461, 1
      %v463 = vadd.f32 %v461, %v462
      %v464 = vsub.f32 0.0, %v463
      %v465 = vsub.f32 2.0, %v386
      %v466 = vlaneseq
      %v467 = vshrl.u32 %v466, 7
      %v468 = vsub.s32 1, %v467
      %v469 = vrot.slane %v465, %v468
      %v470 = vmul.f32 %v390, %v469
      %v471 = vmul.f32 %v394, %v469
      %v472 = vmul.f32 %v398, %v469
      %v473 = vmul.f32 %v402, %v469
      %v474 = vadd.f32 %v377, %v470
      %v475 = vadd.f32 %v378, %v471
      %v476 = vadd.f32 %v379, %v472
      %v477 = vadd.f32 %v380, %v473
      %v478 = vtanh.pop %v474
      %v479 = vtanh.pop %v475
      %v480 = vtanh.pop %v476
      %v481 = vtanh.pop %v477
      %v482 = vmul.f32 %v478, %v204
      %v483 = vmul.f32 %v479, %v209
      %v484 = vmul.f32 %v480, %v214
      %v485 = vmul.f32 %v481, %v219
      %v486 = vadd.f32 %v482, %v483
      %v487 = vadd.f32 %v486, %v484
      %v488 = vadd.f32 %v487, %v485
      %v489 = vrot.slane %v488, 4
      %v490 = vadd.f32 %v488, %v489
      %v491 = vrot.slane %v490, 2
      %v492 = vadd.f32 %v490, %v491
      %v493 = vrot.slane %v492, 1
      %v494 = vadd.f32 %v492, %v493
      %v495 = vsub.f32 0.0, %v494
      %v496 = vsub.f32 3.0, %v386
      %v497 = vlaneseq
      %v498 = vshrl.u32 %v497, 7
      %v499 = vsub.s32 1, %v498
      %v500 = vrot.slane %v496, %v499
      %v501 = vmul.f32 %v390, %v500
      %v502 = vmul.f32 %v394, %v500
      %v503 = vmul.f32 %v398, %v500
      %v504 = vmul.f32 %v402, %v500
      %v505 = vadd.f32 %v377, %v501
      %v506 = vadd.f32 %v378, %v502
      %v507 = vadd.f32 %v379, %v503
      %v508 = vadd.f32 %v380, %v504
      %v509 = vtanh.pop %v505
      %v510 = vtanh.pop %v506
      %v511 = vtanh.pop %v507
      %v512 = vtanh.pop %v508
      %v513 = vmul.f32 %v509, %v204
      %v514 = vmul.f32 %v510, %v209
      %v515 = vmul.f32 %v511, %v214
      %v516 = vmul.f32 %v512, %v219
      %v517 = vadd.f32 %v513, %v514
      %v518 = vadd.f32 %v517, %v515
      %v519 = vadd.f32 %v518, %v516
      %v520 = vrot.slane %v519, 4
      %v521 = vadd.f32 %v519, %v520
      %v522 = vrot.slane %v521, 2
      %v523 = vadd.f32 %v521, %v522
      %v524 = vrot.slane %v523, 1
      %v525 = vadd.f32 %v523, %v524
      %v526 = vsub.f32 0.0, %v525
      %v527 = vmax.f32 %v433, %v464
      %v528 = vmax.f32 %v527, %v495
      %v529 = vmax.f32 %v528, %v526
      %v530 = vsub.f32 %v433, %v529
      %v531 = vmul.f32 %v530, 1.442695
      %v532 = vpow.pop %v531
      %v533 = vsub.f32 %v464, %v529
      %v534 = vmul.f32 %v533, 1.442695
      %v535 = vpow.pop %v534
      %v536 = vsub.f32 %v495, %v529
      %v537 = vmul.f32 %v536, 1.442695
      %v538 = vpow.pop %v537
      %v539 = vsub.f32 %v526, %v529
      %v540 = vmul.f32 %v539, 1.442695
      %v541 = vpow.pop %v540
      %v542 = vadd.f32 %v532, %v535
      %v543 = vadd.f32 %v542, %v538
      %v544 = vadd.f32 %v543, %v541
      %v545 = vmul.f32 %v167, %v544
      %v546 = vadd.f32 %v532, 0.0
      %vm547 = vcmp.ge.f32.partialorder %v545, %v546
      %v548 = vsel %vm547, 1, 0
      %v549 = vcvt.s32.f32 %v548
      %v550 = vadd.f32 %v549, 0.0
      %v551 = vadd.f32 %v546, %v535
      %vm552 = vcmp.ge.f32.partialorder %v545, %v551
      %v553 = vsel %vm552, 1, 0
      %v554 = vcvt.s32.f32 %v553
      %v555 = vadd.f32 %v550, %v554
      %v556 = vadd.f32 %v551, %v538
      %vm557 = vcmp.ge.f32.partialorder %v545, %v556
      %v558 = vsel %vm557, 1, 0
      %v559 = vcvt.s32.f32 %v558
      %v560 = vadd.f32 %v555, %v559
      %v561 = vadd.f32 %v556, %v541
      %vm562 = vcmp.ge.f32.partialorder %v545, %v561
      %v563 = vsel %vm562, 1, 0
      %v564 = vcvt.s32.f32 %v563
      %v565 = vadd.f32 %v560, %v564
      %v566 = vmin.f32 %v565, 3.0
      %v567 = vsub.f32 %v566, %v386
      %v568 = vlaneseq
      %v569 = vshrl.u32 %v568, 7
      %v570 = vsub.s32 1, %v569
      %v571 = vrot.slane %v567, %v570
      %v572 = vmul.f32 %v390, %v571
      %v573 = vmul.f32 %v394, %v571
      %v574 = vmul.f32 %v398, %v571
      %v575 = vmul.f32 %v402, %v571
      %v576 = vadd.f32 %v377, %v572
      %v577 = vadd.f32 %v378, %v573
      %v578 = vadd.f32 %v379, %v574
      %v579 = vadd.f32 %v380, %v575
      %vm580 = vcmp.eq.s32.totalorder %v153, 1
      %v581 = vlaneseq
      %v582 = vshrl.u32 %v581, 7
      %v583 = vsub.s32 1, %v582
      %v584 = vrot.slane %v566, %v583
      %v585 = vsel %vm580, %v584, %v386
      %v586 = vsub.f32 0.0, %v585
      %587 = vset.pattern.permute.xlu0 2
      %588 = vperm.xlu0 %587, %v21
      %v589 = vpop.permute.xlu0 %588
      %591 = vset.pattern.permute.xlu0 2
      %592 = vperm.xlu0 %591, %v22
      %v593 = vpop.permute.xlu0 %592
      %595 = vset.pattern.permute.xlu0 2
      %596 = vperm.xlu0 %595, %v23
      %v597 = vpop.permute.xlu0 %596
      %599 = vset.pattern.permute.xlu0 2
      %600 = vperm.xlu0 %599, %v24
      %v601 = vpop.permute.xlu0 %600
      %v603 = vlaneseq
      %v604 = vshrl.u32 %v603, 7
      %v605 = vsub.s32 2, %v604
      %v606 = vrot.slane %v586, %v605
      %v607 = vmul.f32 %v589, %v606
      %v608 = vmul.f32 %v593, %v606
      %v609 = vmul.f32 %v597, %v606
      %v610 = vmul.f32 %v601, %v606
      %v611 = vadd.f32 %v576, %v607
      %v612 = vadd.f32 %v577, %v608
      %v613 = vadd.f32 %v578, %v609
      %v614 = vadd.f32 %v579, %v610
      %v615 = vtanh.pop %v611
      %v616 = vtanh.pop %v612
      %v617 = vtanh.pop %v613
      %v618 = vtanh.pop %v614
      %v619 = vmul.f32 %v615, %v204
      %v620 = vmul.f32 %v616, %v209
      %v621 = vmul.f32 %v617, %v214
      %v622 = vmul.f32 %v618, %v219
      %v623 = vadd.f32 %v619, %v620
      %v624 = vadd.f32 %v623, %v621
      %v625 = vadd.f32 %v624, %v622
      %v626 = vrot.slane %v625, 4
      %v627 = vadd.f32 %v625, %v626
      %v628 = vrot.slane %v627, 2
      %v629 = vadd.f32 %v627, %v628
      %v630 = vrot.slane %v629, 1
      %v631 = vadd.f32 %v629, %v630
      %v632 = vsub.f32 0.0, %v631
      %v633 = vsub.f32 1.0, %v585
      %v634 = vlaneseq
      %v635 = vshrl.u32 %v634, 7
      %v636 = vsub.s32 2, %v635
      %v637 = vrot.slane %v633, %v636
      %v638 = vmul.f32 %v589, %v637
      %v639 = vmul.f32 %v593, %v637
      %v640 = vmul.f32 %v597, %v637
      %v641 = vmul.f32 %v601, %v637
      %v642 = vadd.f32 %v576, %v638
      %v643 = vadd.f32 %v577, %v639
      %v644 = vadd.f32 %v578, %v640
      %v645 = vadd.f32 %v579, %v641
      %v646 = vtanh.pop %v642
      %v647 = vtanh.pop %v643
      %v648 = vtanh.pop %v644
      %v649 = vtanh.pop %v645
      %v650 = vmul.f32 %v646, %v204
      %v651 = vmul.f32 %v647, %v209
      %v652 = vmul.f32 %v648, %v214
      %v653 = vmul.f32 %v649, %v219
      %v654 = vadd.f32 %v650, %v651
      %v655 = vadd.f32 %v654, %v652
      %v656 = vadd.f32 %v655, %v653
      %v657 = vrot.slane %v656, 4
      %v658 = vadd.f32 %v656, %v657
      %v659 = vrot.slane %v658, 2
      %v660 = vadd.f32 %v658, %v659
      %v661 = vrot.slane %v660, 1
      %v662 = vadd.f32 %v660, %v661
      %v663 = vsub.f32 0.0, %v662
      %v664 = vsub.f32 2.0, %v585
      %v665 = vlaneseq
      %v666 = vshrl.u32 %v665, 7
      %v667 = vsub.s32 2, %v666
      %v668 = vrot.slane %v664, %v667
      %v669 = vmul.f32 %v589, %v668
      %v670 = vmul.f32 %v593, %v668
      %v671 = vmul.f32 %v597, %v668
      %v672 = vmul.f32 %v601, %v668
      %v673 = vadd.f32 %v576, %v669
      %v674 = vadd.f32 %v577, %v670
      %v675 = vadd.f32 %v578, %v671
      %v676 = vadd.f32 %v579, %v672
      %v677 = vtanh.pop %v673
      %v678 = vtanh.pop %v674
      %v679 = vtanh.pop %v675
      %v680 = vtanh.pop %v676
      %v681 = vmul.f32 %v677, %v204
      %v682 = vmul.f32 %v678, %v209
      %v683 = vmul.f32 %v679, %v214
      %v684 = vmul.f32 %v680, %v219
      %v685 = vadd.f32 %v681, %v682
      %v686 = vadd.f32 %v685, %v683
      %v687 = vadd.f32 %v686, %v684
      %v688 = vrot.slane %v687, 4
      %v689 = vadd.f32 %v687, %v688
      %v690 = vrot.slane %v689, 2
      %v691 = vadd.f32 %v689, %v690
      %v692 = vrot.slane %v691, 1
      %v693 = vadd.f32 %v691, %v692
      %v694 = vsub.f32 0.0, %v693
      %v695 = vsub.f32 3.0, %v585
      %v696 = vlaneseq
      %v697 = vshrl.u32 %v696, 7
      %v698 = vsub.s32 2, %v697
      %v699 = vrot.slane %v695, %v698
      %v700 = vmul.f32 %v589, %v699
      %v701 = vmul.f32 %v593, %v699
      %v702 = vmul.f32 %v597, %v699
      %v703 = vmul.f32 %v601, %v699
      %v704 = vadd.f32 %v576, %v700
      %v705 = vadd.f32 %v577, %v701
      %v706 = vadd.f32 %v578, %v702
      %v707 = vadd.f32 %v579, %v703
      %v708 = vtanh.pop %v704
      %v709 = vtanh.pop %v705
      %v710 = vtanh.pop %v706
      %v711 = vtanh.pop %v707
      %v712 = vmul.f32 %v708, %v204
      %v713 = vmul.f32 %v709, %v209
      %v714 = vmul.f32 %v710, %v214
      %v715 = vmul.f32 %v711, %v219
      %v716 = vadd.f32 %v712, %v713
      %v717 = vadd.f32 %v716, %v714
      %v718 = vadd.f32 %v717, %v715
      %v719 = vrot.slane %v718, 4
      %v720 = vadd.f32 %v718, %v719
      %v721 = vrot.slane %v720, 2
      %v722 = vadd.f32 %v720, %v721
      %v723 = vrot.slane %v722, 1
      %v724 = vadd.f32 %v722, %v723
      %v725 = vsub.f32 0.0, %v724
      %v726 = vmax.f32 %v632, %v663
      %v727 = vmax.f32 %v726, %v694
      %v728 = vmax.f32 %v727, %v725
      %v729 = vsub.f32 %v632, %v728
      %v730 = vmul.f32 %v729, 1.442695
      %v731 = vpow.pop %v730
      %v732 = vsub.f32 %v663, %v728
      %v733 = vmul.f32 %v732, 1.442695
      %v734 = vpow.pop %v733
      %v735 = vsub.f32 %v694, %v728
      %v736 = vmul.f32 %v735, 1.442695
      %v737 = vpow.pop %v736
      %v738 = vsub.f32 %v725, %v728
      %v739 = vmul.f32 %v738, 1.442695
      %v740 = vpow.pop %v739
      %v741 = vadd.f32 %v731, %v734
      %v742 = vadd.f32 %v741, %v737
      %v743 = vadd.f32 %v742, %v740
      %v744 = vmul.f32 %v167, %v743
      %v745 = vadd.f32 %v731, 0.0
      %vm746 = vcmp.ge.f32.partialorder %v744, %v745
      %v747 = vsel %vm746, 1, 0
      %v748 = vcvt.s32.f32 %v747
      %v749 = vadd.f32 %v748, 0.0
      %v750 = vadd.f32 %v745, %v734
      %vm751 = vcmp.ge.f32.partialorder %v744, %v750
      %v752 = vsel %vm751, 1, 0
      %v753 = vcvt.s32.f32 %v752
      %v754 = vadd.f32 %v749, %v753
      %v755 = vadd.f32 %v750, %v737
      %vm756 = vcmp.ge.f32.partialorder %v744, %v755
      %v757 = vsel %vm756, 1, 0
      %v758 = vcvt.s32.f32 %v757
      %v759 = vadd.f32 %v754, %v758
      %v760 = vadd.f32 %v755, %v740
      %vm761 = vcmp.ge.f32.partialorder %v744, %v760
      %v762 = vsel %vm761, 1, 0
      %v763 = vcvt.s32.f32 %v762
      %v764 = vadd.f32 %v759, %v763
      %v765 = vmin.f32 %v764, 3.0
      %v766 = vsub.f32 %v765, %v585
      %v767 = vlaneseq
      %v768 = vshrl.u32 %v767, 7
      %v769 = vsub.s32 2, %v768
      %v770 = vrot.slane %v766, %v769
      %v771 = vmul.f32 %v589, %v770
      %v772 = vmul.f32 %v593, %v770
      %v773 = vmul.f32 %v597, %v770
      %v774 = vmul.f32 %v601, %v770
      %v775 = vadd.f32 %v576, %v771
      %v776 = vadd.f32 %v577, %v772
      %v777 = vadd.f32 %v578, %v773
      %v778 = vadd.f32 %v579, %v774
      %vm779 = vcmp.eq.s32.totalorder %v153, 2
      %v780 = vlaneseq
      %v781 = vshrl.u32 %v780, 7
      %v782 = vsub.s32 2, %v781
      %v783 = vrot.slane %v765, %v782
      %v784 = vsel %vm779, %v783, %v585
      %v785 = vsub.f32 0.0, %v784
      %786 = vset.pattern.permute.xlu0 3
      %787 = vperm.xlu0 %786, %v21
      %v788 = vpop.permute.xlu0 %787
      %790 = vset.pattern.permute.xlu0 3
      %791 = vperm.xlu0 %790, %v22
      %v792 = vpop.permute.xlu0 %791
      %794 = vset.pattern.permute.xlu0 3
      %795 = vperm.xlu0 %794, %v23
      %v796 = vpop.permute.xlu0 %795
      %798 = vset.pattern.permute.xlu0 3
      %799 = vperm.xlu0 %798, %v24
      %v800 = vpop.permute.xlu0 %799
      %v802 = vlaneseq
      %v803 = vshrl.u32 %v802, 7
      %v804 = vsub.s32 3, %v803
      %v805 = vrot.slane %v785, %v804
      %v806 = vmul.f32 %v788, %v805
      %v807 = vmul.f32 %v792, %v805
      %v808 = vmul.f32 %v796, %v805
      %v809 = vmul.f32 %v800, %v805
      %v810 = vadd.f32 %v775, %v806
      %v811 = vadd.f32 %v776, %v807
      %v812 = vadd.f32 %v777, %v808
      %v813 = vadd.f32 %v778, %v809
      %v814 = vtanh.pop %v810
      %v815 = vtanh.pop %v811
      %v816 = vtanh.pop %v812
      %v817 = vtanh.pop %v813
      %v818 = vmul.f32 %v814, %v204
      %v819 = vmul.f32 %v815, %v209
      %v820 = vmul.f32 %v816, %v214
      %v821 = vmul.f32 %v817, %v219
      %v822 = vadd.f32 %v818, %v819
      %v823 = vadd.f32 %v822, %v820
      %v824 = vadd.f32 %v823, %v821
      %v825 = vrot.slane %v824, 4
      %v826 = vadd.f32 %v824, %v825
      %v827 = vrot.slane %v826, 2
      %v828 = vadd.f32 %v826, %v827
      %v829 = vrot.slane %v828, 1
      %v830 = vadd.f32 %v828, %v829
      %v831 = vsub.f32 0.0, %v830
      %v832 = vsub.f32 1.0, %v784
      %v833 = vlaneseq
      %v834 = vshrl.u32 %v833, 7
      %v835 = vsub.s32 3, %v834
      %v836 = vrot.slane %v832, %v835
      %v837 = vmul.f32 %v788, %v836
      %v838 = vmul.f32 %v792, %v836
      %v839 = vmul.f32 %v796, %v836
      %v840 = vmul.f32 %v800, %v836
      %v841 = vadd.f32 %v775, %v837
      %v842 = vadd.f32 %v776, %v838
      %v843 = vadd.f32 %v777, %v839
      %v844 = vadd.f32 %v778, %v840
      %v845 = vtanh.pop %v841
      %v846 = vtanh.pop %v842
      %v847 = vtanh.pop %v843
      %v848 = vtanh.pop %v844
      %v849 = vmul.f32 %v845, %v204
      %v850 = vmul.f32 %v846, %v209
      %v851 = vmul.f32 %v847, %v214
      %v852 = vmul.f32 %v848, %v219
      %v853 = vadd.f32 %v849, %v850
      %v854 = vadd.f32 %v853, %v851
      %v855 = vadd.f32 %v854, %v852
      %v856 = vrot.slane %v855, 4
      %v857 = vadd.f32 %v855, %v856
      %v858 = vrot.slane %v857, 2
      %v859 = vadd.f32 %v857, %v858
      %v860 = vrot.slane %v859, 1
      %v861 = vadd.f32 %v859, %v860
      %v862 = vsub.f32 0.0, %v861
      %v863 = vsub.f32 2.0, %v784
      %v864 = vlaneseq
      %v865 = vshrl.u32 %v864, 7
      %v866 = vsub.s32 3, %v865
      %v867 = vrot.slane %v863, %v866
      %v868 = vmul.f32 %v788, %v867
      %v869 = vmul.f32 %v792, %v867
      %v870 = vmul.f32 %v796, %v867
      %v871 = vmul.f32 %v800, %v867
      %v872 = vadd.f32 %v775, %v868
      %v873 = vadd.f32 %v776, %v869
      %v874 = vadd.f32 %v777, %v870
      %v875 = vadd.f32 %v778, %v871
      %v876 = vtanh.pop %v872
      %v877 = vtanh.pop %v873
      %v878 = vtanh.pop %v874
      %v879 = vtanh.pop %v875
      %v880 = vmul.f32 %v876, %v204
      %v881 = vmul.f32 %v877, %v209
      %v882 = vmul.f32 %v878, %v214
      %v883 = vmul.f32 %v879, %v219
      %v884 = vadd.f32 %v880, %v881
      %v885 = vadd.f32 %v884, %v882
      %v886 = vadd.f32 %v885, %v883
      %v887 = vrot.slane %v886, 4
      %v888 = vadd.f32 %v886, %v887
      %v889 = vrot.slane %v888, 2
      %v890 = vadd.f32 %v888, %v889
      %v891 = vrot.slane %v890, 1
      %v892 = vadd.f32 %v890, %v891
      %v893 = vsub.f32 0.0, %v892
      %v894 = vsub.f32 3.0, %v784
      %v895 = vlaneseq
      %v896 = vshrl.u32 %v895, 7
      %v897 = vsub.s32 3, %v896
      %v898 = vrot.slane %v894, %v897
      %v899 = vmul.f32 %v788, %v898
      %v900 = vmul.f32 %v792, %v898
      %v901 = vmul.f32 %v796, %v898
      %v902 = vmul.f32 %v800, %v898
      %v903 = vadd.f32 %v775, %v899
      %v904 = vadd.f32 %v776, %v900
      %v905 = vadd.f32 %v777, %v901
      %v906 = vadd.f32 %v778, %v902
      %v907 = vtanh.pop %v903
      %v908 = vtanh.pop %v904
      %v909 = vtanh.pop %v905
      %v910 = vtanh.pop %v906
      %v911 = vmul.f32 %v907, %v204
      %v912 = vmul.f32 %v908, %v209
      %v913 = vmul.f32 %v909, %v214
      %v914 = vmul.f32 %v910, %v219
      %v915 = vadd.f32 %v911, %v912
      %v916 = vadd.f32 %v915, %v913
      %v917 = vadd.f32 %v916, %v914
      %v918 = vrot.slane %v917, 4
      %v919 = vadd.f32 %v917, %v918
      %v920 = vrot.slane %v919, 2
      %v921 = vadd.f32 %v919, %v920
      %v922 = vrot.slane %v921, 1
      %v923 = vadd.f32 %v921, %v922
      %v924 = vsub.f32 0.0, %v923
      %v925 = vmax.f32 %v831, %v862
      %v926 = vmax.f32 %v925, %v893
      %v927 = vmax.f32 %v926, %v924
      %v928 = vsub.f32 %v831, %v927
      %v929 = vmul.f32 %v928, 1.442695
      %v930 = vpow.pop %v929
      %v931 = vsub.f32 %v862, %v927
      %v932 = vmul.f32 %v931, 1.442695
      %v933 = vpow.pop %v932
      %v934 = vsub.f32 %v893, %v927
      %v935 = vmul.f32 %v934, 1.442695
      %v936 = vpow.pop %v935
      %v937 = vsub.f32 %v924, %v927
      %v938 = vmul.f32 %v937, 1.442695
      %v939 = vpow.pop %v938
      %v940 = vadd.f32 %v930, %v933
      %v941 = vadd.f32 %v940, %v936
      %v942 = vadd.f32 %v941, %v939
      %v943 = vmul.f32 %v167, %v942
      %v944 = vadd.f32 %v930, 0.0
      %vm945 = vcmp.ge.f32.partialorder %v943, %v944
      %v946 = vsel %vm945, 1, 0
      %v947 = vcvt.s32.f32 %v946
      %v948 = vadd.f32 %v947, 0.0
      %v949 = vadd.f32 %v944, %v933
      %vm950 = vcmp.ge.f32.partialorder %v943, %v949
      %v951 = vsel %vm950, 1, 0
      %v952 = vcvt.s32.f32 %v951
      %v953 = vadd.f32 %v948, %v952
      %v954 = vadd.f32 %v949, %v936
      %vm955 = vcmp.ge.f32.partialorder %v943, %v954
      %v956 = vsel %vm955, 1, 0
      %v957 = vcvt.s32.f32 %v956
      %v958 = vadd.f32 %v953, %v957
      %v959 = vadd.f32 %v954, %v939
      %vm960 = vcmp.ge.f32.partialorder %v943, %v959
      %v961 = vsel %vm960, 1, 0
      %v962 = vcvt.s32.f32 %v961
      %v963 = vadd.f32 %v958, %v962
      %v964 = vmin.f32 %v963, 3.0
      %v965 = vsub.f32 %v964, %v784
      %v966 = vlaneseq
      %v967 = vshrl.u32 %v966, 7
      %v968 = vsub.s32 3, %v967
      %v969 = vrot.slane %v965, %v968
      %v970 = vmul.f32 %v788, %v969
      %v971 = vmul.f32 %v792, %v969
      %v972 = vmul.f32 %v796, %v969
      %v973 = vmul.f32 %v800, %v969
      %v974 = vadd.f32 %v775, %v970
      %v975 = vadd.f32 %v776, %v971
      %v976 = vadd.f32 %v777, %v972
      %v977 = vadd.f32 %v778, %v973
      %vm978 = vcmp.eq.s32.totalorder %v153, 3
      %v979 = vlaneseq
      %v980 = vshrl.u32 %v979, 7
      %v981 = vsub.s32 3, %v980
      %v982 = vrot.slane %v964, %v981
      %v983 = vsel %vm978, %v982, %v784
      %v984 = vsub.f32 0.0, %v983
      %985 = vset.pattern.permute.xlu0 4
      %986 = vperm.xlu0 %985, %v21
      %v987 = vpop.permute.xlu0 %986
      %989 = vset.pattern.permute.xlu0 4
      %990 = vperm.xlu0 %989, %v22
      %v991 = vpop.permute.xlu0 %990
      %993 = vset.pattern.permute.xlu0 4
      %994 = vperm.xlu0 %993, %v23
      %v995 = vpop.permute.xlu0 %994
      %997 = vset.pattern.permute.xlu0 4
      %998 = vperm.xlu0 %997, %v24
      %v999 = vpop.permute.xlu0 %998
      %v1001 = vlaneseq
      %v1002 = vshrl.u32 %v1001, 7
      %v1003 = vsub.s32 4, %v1002
      %v1004 = vrot.slane %v984, %v1003
      %v1005 = vmul.f32 %v987, %v1004
      %v1006 = vmul.f32 %v991, %v1004
      %v1007 = vmul.f32 %v995, %v1004
      %v1008 = vmul.f32 %v999, %v1004
      %v1009 = vadd.f32 %v974, %v1005
      %v1010 = vadd.f32 %v975, %v1006
      %v1011 = vadd.f32 %v976, %v1007
      %v1012 = vadd.f32 %v977, %v1008
      %v1013 = vtanh.pop %v1009
      %v1014 = vtanh.pop %v1010
      %v1015 = vtanh.pop %v1011
      %v1016 = vtanh.pop %v1012
      %v1017 = vmul.f32 %v1013, %v204
      %v1018 = vmul.f32 %v1014, %v209
      %v1019 = vmul.f32 %v1015, %v214
      %v1020 = vmul.f32 %v1016, %v219
      %v1021 = vadd.f32 %v1017, %v1018
      %v1022 = vadd.f32 %v1021, %v1019
      %v1023 = vadd.f32 %v1022, %v1020
      %v1024 = vrot.slane %v1023, 4
      %v1025 = vadd.f32 %v1023, %v1024
      %v1026 = vrot.slane %v1025, 2
      %v1027 = vadd.f32 %v1025, %v1026
      %v1028 = vrot.slane %v1027, 1
      %v1029 = vadd.f32 %v1027, %v1028
      %v1030 = vsub.f32 0.0, %v1029
      %v1031 = vsub.f32 1.0, %v983
      %v1032 = vlaneseq
      %v1033 = vshrl.u32 %v1032, 7
      %v1034 = vsub.s32 4, %v1033
      %v1035 = vrot.slane %v1031, %v1034
      %v1036 = vmul.f32 %v987, %v1035
      %v1037 = vmul.f32 %v991, %v1035
      %v1038 = vmul.f32 %v995, %v1035
      %v1039 = vmul.f32 %v999, %v1035
      %v1040 = vadd.f32 %v974, %v1036
      %v1041 = vadd.f32 %v975, %v1037
      %v1042 = vadd.f32 %v976, %v1038
      %v1043 = vadd.f32 %v977, %v1039
      %v1044 = vtanh.pop %v1040
      %v1045 = vtanh.pop %v1041
      %v1046 = vtanh.pop %v1042
      %v1047 = vtanh.pop %v1043
      %v1048 = vmul.f32 %v1044, %v204
      %v1049 = vmul.f32 %v1045, %v209
      %v1050 = vmul.f32 %v1046, %v214
      %v1051 = vmul.f32 %v1047, %v219
      %v1052 = vadd.f32 %v1048, %v1049
      %v1053 = vadd.f32 %v1052, %v1050
      %v1054 = vadd.f32 %v1053, %v1051
      %v1055 = vrot.slane %v1054, 4
      %v1056 = vadd.f32 %v1054, %v1055
      %v1057 = vrot.slane %v1056, 2
      %v1058 = vadd.f32 %v1056, %v1057
      %v1059 = vrot.slane %v1058, 1
      %v1060 = vadd.f32 %v1058, %v1059
      %v1061 = vsub.f32 0.0, %v1060
      %v1062 = vsub.f32 2.0, %v983
      %v1063 = vlaneseq
      %v1064 = vshrl.u32 %v1063, 7
      %v1065 = vsub.s32 4, %v1064
      %v1066 = vrot.slane %v1062, %v1065
      %v1067 = vmul.f32 %v987, %v1066
      %v1068 = vmul.f32 %v991, %v1066
      %v1069 = vmul.f32 %v995, %v1066
      %v1070 = vmul.f32 %v999, %v1066
      %v1071 = vadd.f32 %v974, %v1067
      %v1072 = vadd.f32 %v975, %v1068
      %v1073 = vadd.f32 %v976, %v1069
      %v1074 = vadd.f32 %v977, %v1070
      %v1075 = vtanh.pop %v1071
      %v1076 = vtanh.pop %v1072
      %v1077 = vtanh.pop %v1073
      %v1078 = vtanh.pop %v1074
      %v1079 = vmul.f32 %v1075, %v204
      %v1080 = vmul.f32 %v1076, %v209
      %v1081 = vmul.f32 %v1077, %v214
      %v1082 = vmul.f32 %v1078, %v219
      %v1083 = vadd.f32 %v1079, %v1080
      %v1084 = vadd.f32 %v1083, %v1081
      %v1085 = vadd.f32 %v1084, %v1082
      %v1086 = vrot.slane %v1085, 4
      %v1087 = vadd.f32 %v1085, %v1086
      %v1088 = vrot.slane %v1087, 2
      %v1089 = vadd.f32 %v1087, %v1088
      %v1090 = vrot.slane %v1089, 1
      %v1091 = vadd.f32 %v1089, %v1090
      %v1092 = vsub.f32 0.0, %v1091
      %v1093 = vsub.f32 3.0, %v983
      %v1094 = vlaneseq
      %v1095 = vshrl.u32 %v1094, 7
      %v1096 = vsub.s32 4, %v1095
      %v1097 = vrot.slane %v1093, %v1096
      %v1098 = vmul.f32 %v987, %v1097
      %v1099 = vmul.f32 %v991, %v1097
      %v1100 = vmul.f32 %v995, %v1097
      %v1101 = vmul.f32 %v999, %v1097
      %v1102 = vadd.f32 %v974, %v1098
      %v1103 = vadd.f32 %v975, %v1099
      %v1104 = vadd.f32 %v976, %v1100
      %v1105 = vadd.f32 %v977, %v1101
      %v1106 = vtanh.pop %v1102
      %v1107 = vtanh.pop %v1103
      %v1108 = vtanh.pop %v1104
      %v1109 = vtanh.pop %v1105
      %v1110 = vmul.f32 %v1106, %v204
      %v1111 = vmul.f32 %v1107, %v209
      %v1112 = vmul.f32 %v1108, %v214
      %v1113 = vmul.f32 %v1109, %v219
      %v1114 = vadd.f32 %v1110, %v1111
      %v1115 = vadd.f32 %v1114, %v1112
      %v1116 = vadd.f32 %v1115, %v1113
      %v1117 = vrot.slane %v1116, 4
      %v1118 = vadd.f32 %v1116, %v1117
      %v1119 = vrot.slane %v1118, 2
      %v1120 = vadd.f32 %v1118, %v1119
      %v1121 = vrot.slane %v1120, 1
      %v1122 = vadd.f32 %v1120, %v1121
      %v1123 = vsub.f32 0.0, %v1122
      %v1124 = vmax.f32 %v1030, %v1061
      %v1125 = vmax.f32 %v1124, %v1092
      %v1126 = vmax.f32 %v1125, %v1123
      %v1127 = vsub.f32 %v1030, %v1126
      %v1128 = vmul.f32 %v1127, 1.442695
      %v1129 = vpow.pop %v1128
      %v1130 = vsub.f32 %v1061, %v1126
      %v1131 = vmul.f32 %v1130, 1.442695
      %v1132 = vpow.pop %v1131
      %v1133 = vsub.f32 %v1092, %v1126
      %v1134 = vmul.f32 %v1133, 1.442695
      %v1135 = vpow.pop %v1134
      %v1136 = vsub.f32 %v1123, %v1126
      %v1137 = vmul.f32 %v1136, 1.442695
      %v1138 = vpow.pop %v1137
      %v1139 = vadd.f32 %v1129, %v1132
      %v1140 = vadd.f32 %v1139, %v1135
      %v1141 = vadd.f32 %v1140, %v1138
      %v1142 = vmul.f32 %v167, %v1141
      %v1143 = vadd.f32 %v1129, 0.0
      %vm1144 = vcmp.ge.f32.partialorder %v1142, %v1143
      %v1145 = vsel %vm1144, 1, 0
      %v1146 = vcvt.s32.f32 %v1145
      %v1147 = vadd.f32 %v1146, 0.0
      %v1148 = vadd.f32 %v1143, %v1132
      %vm1149 = vcmp.ge.f32.partialorder %v1142, %v1148
      %v1150 = vsel %vm1149, 1, 0
      %v1151 = vcvt.s32.f32 %v1150
      %v1152 = vadd.f32 %v1147, %v1151
      %v1153 = vadd.f32 %v1148, %v1135
      %vm1154 = vcmp.ge.f32.partialorder %v1142, %v1153
      %v1155 = vsel %vm1154, 1, 0
      %v1156 = vcvt.s32.f32 %v1155
      %v1157 = vadd.f32 %v1152, %v1156
      %v1158 = vadd.f32 %v1153, %v1138
      %vm1159 = vcmp.ge.f32.partialorder %v1142, %v1158
      %v1160 = vsel %vm1159, 1, 0
      %v1161 = vcvt.s32.f32 %v1160
      %v1162 = vadd.f32 %v1157, %v1161
      %v1163 = vmin.f32 %v1162, 3.0
      %v1164 = vsub.f32 %v1163, %v983
      %v1165 = vlaneseq
      %v1166 = vshrl.u32 %v1165, 7
      %v1167 = vsub.s32 4, %v1166
      %v1168 = vrot.slane %v1164, %v1167
      %v1169 = vmul.f32 %v987, %v1168
      %v1170 = vmul.f32 %v991, %v1168
      %v1171 = vmul.f32 %v995, %v1168
      %v1172 = vmul.f32 %v999, %v1168
      %v1173 = vadd.f32 %v974, %v1169
      %v1174 = vadd.f32 %v975, %v1170
      %v1175 = vadd.f32 %v976, %v1171
      %v1176 = vadd.f32 %v977, %v1172
      %vm1177 = vcmp.eq.s32.totalorder %v153, 4
      %v1178 = vlaneseq
      %v1179 = vshrl.u32 %v1178, 7
      %v1180 = vsub.s32 4, %v1179
      %v1181 = vrot.slane %v1163, %v1180
      %v1182 = vsel %vm1177, %v1181, %v983
      %v1183 = vsub.f32 0.0, %v1182
      %1184 = vset.pattern.permute.xlu0 5
      %1185 = vperm.xlu0 %1184, %v21
      %v1186 = vpop.permute.xlu0 %1185
      %1188 = vset.pattern.permute.xlu0 5
      %1189 = vperm.xlu0 %1188, %v22
      %v1190 = vpop.permute.xlu0 %1189
      %1192 = vset.pattern.permute.xlu0 5
      %1193 = vperm.xlu0 %1192, %v23
      %v1194 = vpop.permute.xlu0 %1193
      %1196 = vset.pattern.permute.xlu0 5
      %1197 = vperm.xlu0 %1196, %v24
      %v1198 = vpop.permute.xlu0 %1197
      %v1200 = vlaneseq
      %v1201 = vshrl.u32 %v1200, 7
      %v1202 = vsub.s32 5, %v1201
      %v1203 = vrot.slane %v1183, %v1202
      %v1204 = vmul.f32 %v1186, %v1203
      %v1205 = vmul.f32 %v1190, %v1203
      %v1206 = vmul.f32 %v1194, %v1203
      %v1207 = vmul.f32 %v1198, %v1203
      %v1208 = vadd.f32 %v1173, %v1204
      %v1209 = vadd.f32 %v1174, %v1205
      %v1210 = vadd.f32 %v1175, %v1206
      %v1211 = vadd.f32 %v1176, %v1207
      %v1212 = vtanh.pop %v1208
      %v1213 = vtanh.pop %v1209
      %v1214 = vtanh.pop %v1210
      %v1215 = vtanh.pop %v1211
      %v1216 = vmul.f32 %v1212, %v204
      %v1217 = vmul.f32 %v1213, %v209
      %v1218 = vmul.f32 %v1214, %v214
      %v1219 = vmul.f32 %v1215, %v219
      %v1220 = vadd.f32 %v1216, %v1217
      %v1221 = vadd.f32 %v1220, %v1218
      %v1222 = vadd.f32 %v1221, %v1219
      %v1223 = vrot.slane %v1222, 4
      %v1224 = vadd.f32 %v1222, %v1223
      %v1225 = vrot.slane %v1224, 2
      %v1226 = vadd.f32 %v1224, %v1225
      %v1227 = vrot.slane %v1226, 1
      %v1228 = vadd.f32 %v1226, %v1227
      %v1229 = vsub.f32 0.0, %v1228
      %v1230 = vsub.f32 1.0, %v1182
      %v1231 = vlaneseq
      %v1232 = vshrl.u32 %v1231, 7
      %v1233 = vsub.s32 5, %v1232
      %v1234 = vrot.slane %v1230, %v1233
      %v1235 = vmul.f32 %v1186, %v1234
      %v1236 = vmul.f32 %v1190, %v1234
      %v1237 = vmul.f32 %v1194, %v1234
      %v1238 = vmul.f32 %v1198, %v1234
      %v1239 = vadd.f32 %v1173, %v1235
      %v1240 = vadd.f32 %v1174, %v1236
      %v1241 = vadd.f32 %v1175, %v1237
      %v1242 = vadd.f32 %v1176, %v1238
      %v1243 = vtanh.pop %v1239
      %v1244 = vtanh.pop %v1240
      %v1245 = vtanh.pop %v1241
      %v1246 = vtanh.pop %v1242
      %v1247 = vmul.f32 %v1243, %v204
      %v1248 = vmul.f32 %v1244, %v209
      %v1249 = vmul.f32 %v1245, %v214
      %v1250 = vmul.f32 %v1246, %v219
      %v1251 = vadd.f32 %v1247, %v1248
      %v1252 = vadd.f32 %v1251, %v1249
      %v1253 = vadd.f32 %v1252, %v1250
      %v1254 = vrot.slane %v1253, 4
      %v1255 = vadd.f32 %v1253, %v1254
      %v1256 = vrot.slane %v1255, 2
      %v1257 = vadd.f32 %v1255, %v1256
      %v1258 = vrot.slane %v1257, 1
      %v1259 = vadd.f32 %v1257, %v1258
      %v1260 = vsub.f32 0.0, %v1259
      %v1261 = vsub.f32 2.0, %v1182
      %v1262 = vlaneseq
      %v1263 = vshrl.u32 %v1262, 7
      %v1264 = vsub.s32 5, %v1263
      %v1265 = vrot.slane %v1261, %v1264
      %v1266 = vmul.f32 %v1186, %v1265
      %v1267 = vmul.f32 %v1190, %v1265
      %v1268 = vmul.f32 %v1194, %v1265
      %v1269 = vmul.f32 %v1198, %v1265
      %v1270 = vadd.f32 %v1173, %v1266
      %v1271 = vadd.f32 %v1174, %v1267
      %v1272 = vadd.f32 %v1175, %v1268
      %v1273 = vadd.f32 %v1176, %v1269
      %v1274 = vtanh.pop %v1270
      %v1275 = vtanh.pop %v1271
      %v1276 = vtanh.pop %v1272
      %v1277 = vtanh.pop %v1273
      %v1278 = vmul.f32 %v1274, %v204
      %v1279 = vmul.f32 %v1275, %v209
      %v1280 = vmul.f32 %v1276, %v214
      %v1281 = vmul.f32 %v1277, %v219
      %v1282 = vadd.f32 %v1278, %v1279
      %v1283 = vadd.f32 %v1282, %v1280
      %v1284 = vadd.f32 %v1283, %v1281
      %v1285 = vrot.slane %v1284, 4
      %v1286 = vadd.f32 %v1284, %v1285
      %v1287 = vrot.slane %v1286, 2
      %v1288 = vadd.f32 %v1286, %v1287
      %v1289 = vrot.slane %v1288, 1
      %v1290 = vadd.f32 %v1288, %v1289
      %v1291 = vsub.f32 0.0, %v1290
      %v1292 = vsub.f32 3.0, %v1182
      %v1293 = vlaneseq
      %v1294 = vshrl.u32 %v1293, 7
      %v1295 = vsub.s32 5, %v1294
      %v1296 = vrot.slane %v1292, %v1295
      %v1297 = vmul.f32 %v1186, %v1296
      %v1298 = vmul.f32 %v1190, %v1296
      %v1299 = vmul.f32 %v1194, %v1296
      %v1300 = vmul.f32 %v1198, %v1296
      %v1301 = vadd.f32 %v1173, %v1297
      %v1302 = vadd.f32 %v1174, %v1298
      %v1303 = vadd.f32 %v1175, %v1299
      %v1304 = vadd.f32 %v1176, %v1300
      %v1305 = vtanh.pop %v1301
      %v1306 = vtanh.pop %v1302
      %v1307 = vtanh.pop %v1303
      %v1308 = vtanh.pop %v1304
      %v1309 = vmul.f32 %v1305, %v204
      %v1310 = vmul.f32 %v1306, %v209
      %v1311 = vmul.f32 %v1307, %v214
      %v1312 = vmul.f32 %v1308, %v219
      %v1313 = vadd.f32 %v1309, %v1310
      %v1314 = vadd.f32 %v1313, %v1311
      %v1315 = vadd.f32 %v1314, %v1312
      %v1316 = vrot.slane %v1315, 4
      %v1317 = vadd.f32 %v1315, %v1316
      %v1318 = vrot.slane %v1317, 2
      %v1319 = vadd.f32 %v1317, %v1318
      %v1320 = vrot.slane %v1319, 1
      %v1321 = vadd.f32 %v1319, %v1320
      %v1322 = vsub.f32 0.0, %v1321
      %v1323 = vmax.f32 %v1229, %v1260
      %v1324 = vmax.f32 %v1323, %v1291
      %v1325 = vmax.f32 %v1324, %v1322
      %v1326 = vsub.f32 %v1229, %v1325
      %v1327 = vmul.f32 %v1326, 1.442695
      %v1328 = vpow.pop %v1327
      %v1329 = vsub.f32 %v1260, %v1325
      %v1330 = vmul.f32 %v1329, 1.442695
      %v1331 = vpow.pop %v1330
      %v1332 = vsub.f32 %v1291, %v1325
      %v1333 = vmul.f32 %v1332, 1.442695
      %v1334 = vpow.pop %v1333
      %v1335 = vsub.f32 %v1322, %v1325
      %v1336 = vmul.f32 %v1335, 1.442695
      %v1337 = vpow.pop %v1336
      %v1338 = vadd.f32 %v1328, %v1331
      %v1339 = vadd.f32 %v1338, %v1334
      %v1340 = vadd.f32 %v1339, %v1337
      %v1341 = vmul.f32 %v167, %v1340
      %v1342 = vadd.f32 %v1328, 0.0
      %vm1343 = vcmp.ge.f32.partialorder %v1341, %v1342
      %v1344 = vsel %vm1343, 1, 0
      %v1345 = vcvt.s32.f32 %v1344
      %v1346 = vadd.f32 %v1345, 0.0
      %v1347 = vadd.f32 %v1342, %v1331
      %vm1348 = vcmp.ge.f32.partialorder %v1341, %v1347
      %v1349 = vsel %vm1348, 1, 0
      %v1350 = vcvt.s32.f32 %v1349
      %v1351 = vadd.f32 %v1346, %v1350
      %v1352 = vadd.f32 %v1347, %v1334
      %vm1353 = vcmp.ge.f32.partialorder %v1341, %v1352
      %v1354 = vsel %vm1353, 1, 0
      %v1355 = vcvt.s32.f32 %v1354
      %v1356 = vadd.f32 %v1351, %v1355
      %v1357 = vadd.f32 %v1352, %v1337
      %vm1358 = vcmp.ge.f32.partialorder %v1341, %v1357
      %v1359 = vsel %vm1358, 1, 0
      %v1360 = vcvt.s32.f32 %v1359
      %v1361 = vadd.f32 %v1356, %v1360
      %v1362 = vmin.f32 %v1361, 3.0
      %v1363 = vsub.f32 %v1362, %v1182
      %v1364 = vlaneseq
      %v1365 = vshrl.u32 %v1364, 7
      %v1366 = vsub.s32 5, %v1365
      %v1367 = vrot.slane %v1363, %v1366
      %v1368 = vmul.f32 %v1186, %v1367
      %v1369 = vmul.f32 %v1190, %v1367
      %v1370 = vmul.f32 %v1194, %v1367
      %v1371 = vmul.f32 %v1198, %v1367
      %v1372 = vadd.f32 %v1173, %v1368
      %v1373 = vadd.f32 %v1174, %v1369
      %v1374 = vadd.f32 %v1175, %v1370
      %v1375 = vadd.f32 %v1176, %v1371
      %vm1376 = vcmp.eq.s32.totalorder %v153, 5
      %v1377 = vlaneseq
      %v1378 = vshrl.u32 %v1377, 7
      %v1379 = vsub.s32 5, %v1378
      %v1380 = vrot.slane %v1362, %v1379
      %v1381 = vsel %vm1376, %v1380, %v1182
      %v1382 = vsub.f32 0.0, %v1381
      %1383 = vset.pattern.permute.xlu0 6
      %1384 = vperm.xlu0 %1383, %v21
      %v1385 = vpop.permute.xlu0 %1384
      %1387 = vset.pattern.permute.xlu0 6
      %1388 = vperm.xlu0 %1387, %v22
      %v1389 = vpop.permute.xlu0 %1388
      %1391 = vset.pattern.permute.xlu0 6
      %1392 = vperm.xlu0 %1391, %v23
      %v1393 = vpop.permute.xlu0 %1392
      %1395 = vset.pattern.permute.xlu0 6
      %1396 = vperm.xlu0 %1395, %v24
      %v1397 = vpop.permute.xlu0 %1396
      %v1399 = vlaneseq
      %v1400 = vshrl.u32 %v1399, 7
      %v1401 = vsub.s32 6, %v1400
      %v1402 = vrot.slane %v1382, %v1401
      %v1403 = vmul.f32 %v1385, %v1402
      %v1404 = vmul.f32 %v1389, %v1402
      %v1405 = vmul.f32 %v1393, %v1402
      %v1406 = vmul.f32 %v1397, %v1402
      %v1407 = vadd.f32 %v1372, %v1403
      %v1408 = vadd.f32 %v1373, %v1404
      %v1409 = vadd.f32 %v1374, %v1405
      %v1410 = vadd.f32 %v1375, %v1406
      %v1411 = vtanh.pop %v1407
      %v1412 = vtanh.pop %v1408
      %v1413 = vtanh.pop %v1409
      %v1414 = vtanh.pop %v1410
      %v1415 = vmul.f32 %v1411, %v204
      %v1416 = vmul.f32 %v1412, %v209
      %v1417 = vmul.f32 %v1413, %v214
      %v1418 = vmul.f32 %v1414, %v219
      %v1419 = vadd.f32 %v1415, %v1416
      %v1420 = vadd.f32 %v1419, %v1417
      %v1421 = vadd.f32 %v1420, %v1418
      %v1422 = vrot.slane %v1421, 4
      %v1423 = vadd.f32 %v1421, %v1422
      %v1424 = vrot.slane %v1423, 2
      %v1425 = vadd.f32 %v1423, %v1424
      %v1426 = vrot.slane %v1425, 1
      %v1427 = vadd.f32 %v1425, %v1426
      %v1428 = vsub.f32 0.0, %v1427
      %v1429 = vsub.f32 1.0, %v1381
      %v1430 = vlaneseq
      %v1431 = vshrl.u32 %v1430, 7
      %v1432 = vsub.s32 6, %v1431
      %v1433 = vrot.slane %v1429, %v1432
      %v1434 = vmul.f32 %v1385, %v1433
      %v1435 = vmul.f32 %v1389, %v1433
      %v1436 = vmul.f32 %v1393, %v1433
      %v1437 = vmul.f32 %v1397, %v1433
      %v1438 = vadd.f32 %v1372, %v1434
      %v1439 = vadd.f32 %v1373, %v1435
      %v1440 = vadd.f32 %v1374, %v1436
      %v1441 = vadd.f32 %v1375, %v1437
      %v1442 = vtanh.pop %v1438
      %v1443 = vtanh.pop %v1439
      %v1444 = vtanh.pop %v1440
      %v1445 = vtanh.pop %v1441
      %v1446 = vmul.f32 %v1442, %v204
      %v1447 = vmul.f32 %v1443, %v209
      %v1448 = vmul.f32 %v1444, %v214
      %v1449 = vmul.f32 %v1445, %v219
      %v1450 = vadd.f32 %v1446, %v1447
      %v1451 = vadd.f32 %v1450, %v1448
      %v1452 = vadd.f32 %v1451, %v1449
      %v1453 = vrot.slane %v1452, 4
      %v1454 = vadd.f32 %v1452, %v1453
      %v1455 = vrot.slane %v1454, 2
      %v1456 = vadd.f32 %v1454, %v1455
      %v1457 = vrot.slane %v1456, 1
      %v1458 = vadd.f32 %v1456, %v1457
      %v1459 = vsub.f32 0.0, %v1458
      %v1460 = vsub.f32 2.0, %v1381
      %v1461 = vlaneseq
      %v1462 = vshrl.u32 %v1461, 7
      %v1463 = vsub.s32 6, %v1462
      %v1464 = vrot.slane %v1460, %v1463
      %v1465 = vmul.f32 %v1385, %v1464
      %v1466 = vmul.f32 %v1389, %v1464
      %v1467 = vmul.f32 %v1393, %v1464
      %v1468 = vmul.f32 %v1397, %v1464
      %v1469 = vadd.f32 %v1372, %v1465
      %v1470 = vadd.f32 %v1373, %v1466
      %v1471 = vadd.f32 %v1374, %v1467
      %v1472 = vadd.f32 %v1375, %v1468
      %v1473 = vtanh.pop %v1469
      %v1474 = vtanh.pop %v1470
      %v1475 = vtanh.pop %v1471
      %v1476 = vtanh.pop %v1472
      %v1477 = vmul.f32 %v1473, %v204
      %v1478 = vmul.f32 %v1474, %v209
      %v1479 = vmul.f32 %v1475, %v214
      %v1480 = vmul.f32 %v1476, %v219
      %v1481 = vadd.f32 %v1477, %v1478
      %v1482 = vadd.f32 %v1481, %v1479
      %v1483 = vadd.f32 %v1482, %v1480
      %v1484 = vrot.slane %v1483, 4
      %v1485 = vadd.f32 %v1483, %v1484
      %v1486 = vrot.slane %v1485, 2
      %v1487 = vadd.f32 %v1485, %v1486
      %v1488 = vrot.slane %v1487, 1
      %v1489 = vadd.f32 %v1487, %v1488
      %v1490 = vsub.f32 0.0, %v1489
      %v1491 = vsub.f32 3.0, %v1381
      %v1492 = vlaneseq
      %v1493 = vshrl.u32 %v1492, 7
      %v1494 = vsub.s32 6, %v1493
      %v1495 = vrot.slane %v1491, %v1494
      %v1496 = vmul.f32 %v1385, %v1495
      %v1497 = vmul.f32 %v1389, %v1495
      %v1498 = vmul.f32 %v1393, %v1495
      %v1499 = vmul.f32 %v1397, %v1495
      %v1500 = vadd.f32 %v1372, %v1496
      %v1501 = vadd.f32 %v1373, %v1497
      %v1502 = vadd.f32 %v1374, %v1498
      %v1503 = vadd.f32 %v1375, %v1499
      %v1504 = vtanh.pop %v1500
      %v1505 = vtanh.pop %v1501
      %v1506 = vtanh.pop %v1502
      %v1507 = vtanh.pop %v1503
      %v1508 = vmul.f32 %v1504, %v204
      %v1509 = vmul.f32 %v1505, %v209
      %v1510 = vmul.f32 %v1506, %v214
      %v1511 = vmul.f32 %v1507, %v219
      %v1512 = vadd.f32 %v1508, %v1509
      %v1513 = vadd.f32 %v1512, %v1510
      %v1514 = vadd.f32 %v1513, %v1511
      %v1515 = vrot.slane %v1514, 4
      %v1516 = vadd.f32 %v1514, %v1515
      %v1517 = vrot.slane %v1516, 2
      %v1518 = vadd.f32 %v1516, %v1517
      %v1519 = vrot.slane %v1518, 1
      %v1520 = vadd.f32 %v1518, %v1519
      %v1521 = vsub.f32 0.0, %v1520
      %v1522 = vmax.f32 %v1428, %v1459
      %v1523 = vmax.f32 %v1522, %v1490
      %v1524 = vmax.f32 %v1523, %v1521
      %v1525 = vsub.f32 %v1428, %v1524
      %v1526 = vmul.f32 %v1525, 1.442695
      %v1527 = vpow.pop %v1526
      %v1528 = vsub.f32 %v1459, %v1524
      %v1529 = vmul.f32 %v1528, 1.442695
      %v1530 = vpow.pop %v1529
      %v1531 = vsub.f32 %v1490, %v1524
      %v1532 = vmul.f32 %v1531, 1.442695
      %v1533 = vpow.pop %v1532
      %v1534 = vsub.f32 %v1521, %v1524
      %v1535 = vmul.f32 %v1534, 1.442695
      %v1536 = vpow.pop %v1535
      %v1537 = vadd.f32 %v1527, %v1530
      %v1538 = vadd.f32 %v1537, %v1533
      %v1539 = vadd.f32 %v1538, %v1536
      %v1540 = vmul.f32 %v167, %v1539
      %v1541 = vadd.f32 %v1527, 0.0
      %vm1542 = vcmp.ge.f32.partialorder %v1540, %v1541
      %v1543 = vsel %vm1542, 1, 0
      %v1544 = vcvt.s32.f32 %v1543
      %v1545 = vadd.f32 %v1544, 0.0
      %v1546 = vadd.f32 %v1541, %v1530
      %vm1547 = vcmp.ge.f32.partialorder %v1540, %v1546
      %v1548 = vsel %vm1547, 1, 0
      %v1549 = vcvt.s32.f32 %v1548
      %v1550 = vadd.f32 %v1545, %v1549
      %v1551 = vadd.f32 %v1546, %v1533
      %vm1552 = vcmp.ge.f32.partialorder %v1540, %v1551
      %v1553 = vsel %vm1552, 1, 0
      %v1554 = vcvt.s32.f32 %v1553
      %v1555 = vadd.f32 %v1550, %v1554
      %v1556 = vadd.f32 %v1551, %v1536
      %vm1557 = vcmp.ge.f32.partialorder %v1540, %v1556
      %v1558 = vsel %vm1557, 1, 0
      %v1559 = vcvt.s32.f32 %v1558
      %v1560 = vadd.f32 %v1555, %v1559
      %v1561 = vmin.f32 %v1560, 3.0
      %v1562 = vsub.f32 %v1561, %v1381
      %v1563 = vlaneseq
      %v1564 = vshrl.u32 %v1563, 7
      %v1565 = vsub.s32 6, %v1564
      %v1566 = vrot.slane %v1562, %v1565
      %v1567 = vmul.f32 %v1385, %v1566
      %v1568 = vmul.f32 %v1389, %v1566
      %v1569 = vmul.f32 %v1393, %v1566
      %v1570 = vmul.f32 %v1397, %v1566
      %v1571 = vadd.f32 %v1372, %v1567
      %v1572 = vadd.f32 %v1373, %v1568
      %v1573 = vadd.f32 %v1374, %v1569
      %v1574 = vadd.f32 %v1375, %v1570
      %vm1575 = vcmp.eq.s32.totalorder %v153, 6
      %v1576 = vlaneseq
      %v1577 = vshrl.u32 %v1576, 7
      %v1578 = vsub.s32 6, %v1577
      %v1579 = vrot.slane %v1561, %v1578
      %v1580 = vsel %vm1575, %v1579, %v1381
      %v1581 = vsub.f32 0.0, %v1580
      %1582 = vset.pattern.permute.xlu0 7
      %1583 = vperm.xlu0 %1582, %v21
      %v1584 = vpop.permute.xlu0 %1583
      %1586 = vset.pattern.permute.xlu0 7
      %1587 = vperm.xlu0 %1586, %v22
      %v1588 = vpop.permute.xlu0 %1587
      %1590 = vset.pattern.permute.xlu0 7
      %1591 = vperm.xlu0 %1590, %v23
      %v1592 = vpop.permute.xlu0 %1591
      %1594 = vset.pattern.permute.xlu0 7
      %1595 = vperm.xlu0 %1594, %v24
      %v1596 = vpop.permute.xlu0 %1595
      %v1598 = vlaneseq
      %v1599 = vshrl.u32 %v1598, 7
      %v1600 = vsub.s32 7, %v1599
      %v1601 = vrot.slane %v1581, %v1600
      %v1602 = vmul.f32 %v1584, %v1601
      %v1603 = vmul.f32 %v1588, %v1601
      %v1604 = vmul.f32 %v1592, %v1601
      %v1605 = vmul.f32 %v1596, %v1601
      %v1606 = vadd.f32 %v1571, %v1602
      %v1607 = vadd.f32 %v1572, %v1603
      %v1608 = vadd.f32 %v1573, %v1604
      %v1609 = vadd.f32 %v1574, %v1605
      %v1610 = vtanh.pop %v1606
      %v1611 = vtanh.pop %v1607
      %v1612 = vtanh.pop %v1608
      %v1613 = vtanh.pop %v1609
      %v1614 = vmul.f32 %v1610, %v204
      %v1615 = vmul.f32 %v1611, %v209
      %v1616 = vmul.f32 %v1612, %v214
      %v1617 = vmul.f32 %v1613, %v219
      %v1618 = vadd.f32 %v1614, %v1615
      %v1619 = vadd.f32 %v1618, %v1616
      %v1620 = vadd.f32 %v1619, %v1617
      %v1621 = vrot.slane %v1620, 4
      %v1622 = vadd.f32 %v1620, %v1621
      %v1623 = vrot.slane %v1622, 2
      %v1624 = vadd.f32 %v1622, %v1623
      %v1625 = vrot.slane %v1624, 1
      %v1626 = vadd.f32 %v1624, %v1625
      %v1627 = vsub.f32 0.0, %v1626
      %v1628 = vsub.f32 1.0, %v1580
      %v1629 = vlaneseq
      %v1630 = vshrl.u32 %v1629, 7
      %v1631 = vsub.s32 7, %v1630
      %v1632 = vrot.slane %v1628, %v1631
      %v1633 = vmul.f32 %v1584, %v1632
      %v1634 = vmul.f32 %v1588, %v1632
      %v1635 = vmul.f32 %v1592, %v1632
      %v1636 = vmul.f32 %v1596, %v1632
      %v1637 = vadd.f32 %v1571, %v1633
      %v1638 = vadd.f32 %v1572, %v1634
      %v1639 = vadd.f32 %v1573, %v1635
      %v1640 = vadd.f32 %v1574, %v1636
      %v1641 = vtanh.pop %v1637
      %v1642 = vtanh.pop %v1638
      %v1643 = vtanh.pop %v1639
      %v1644 = vtanh.pop %v1640
      %v1645 = vmul.f32 %v1641, %v204
      %v1646 = vmul.f32 %v1642, %v209
      %v1647 = vmul.f32 %v1643, %v214
      %v1648 = vmul.f32 %v1644, %v219
      %v1649 = vadd.f32 %v1645, %v1646
      %v1650 = vadd.f32 %v1649, %v1647
      %v1651 = vadd.f32 %v1650, %v1648
      %v1652 = vrot.slane %v1651, 4
      %v1653 = vadd.f32 %v1651, %v1652
      %v1654 = vrot.slane %v1653, 2
      %v1655 = vadd.f32 %v1653, %v1654
      %v1656 = vrot.slane %v1655, 1
      %v1657 = vadd.f32 %v1655, %v1656
      %v1658 = vsub.f32 0.0, %v1657
      %v1659 = vsub.f32 2.0, %v1580
      %v1660 = vlaneseq
      %v1661 = vshrl.u32 %v1660, 7
      %v1662 = vsub.s32 7, %v1661
      %v1663 = vrot.slane %v1659, %v1662
      %v1664 = vmul.f32 %v1584, %v1663
      %v1665 = vmul.f32 %v1588, %v1663
      %v1666 = vmul.f32 %v1592, %v1663
      %v1667 = vmul.f32 %v1596, %v1663
      %v1668 = vadd.f32 %v1571, %v1664
      %v1669 = vadd.f32 %v1572, %v1665
      %v1670 = vadd.f32 %v1573, %v1666
      %v1671 = vadd.f32 %v1574, %v1667
      %v1672 = vtanh.pop %v1668
      %v1673 = vtanh.pop %v1669
      %v1674 = vtanh.pop %v1670
      %v1675 = vtanh.pop %v1671
      %v1676 = vmul.f32 %v1672, %v204
      %v1677 = vmul.f32 %v1673, %v209
      %v1678 = vmul.f32 %v1674, %v214
      %v1679 = vmul.f32 %v1675, %v219
      %v1680 = vadd.f32 %v1676, %v1677
      %v1681 = vadd.f32 %v1680, %v1678
      %v1682 = vadd.f32 %v1681, %v1679
      %v1683 = vrot.slane %v1682, 4
      %v1684 = vadd.f32 %v1682, %v1683
      %v1685 = vrot.slane %v1684, 2
      %v1686 = vadd.f32 %v1684, %v1685
      %v1687 = vrot.slane %v1686, 1
      %v1688 = vadd.f32 %v1686, %v1687
      %v1689 = vsub.f32 0.0, %v1688
      %v1690 = vsub.f32 3.0, %v1580
      %v1691 = vlaneseq
      %v1692 = vshrl.u32 %v1691, 7
      %v1693 = vsub.s32 7, %v1692
      %v1694 = vrot.slane %v1690, %v1693
      %v1695 = vmul.f32 %v1584, %v1694
      %v1696 = vmul.f32 %v1588, %v1694
      %v1697 = vmul.f32 %v1592, %v1694
      %v1698 = vmul.f32 %v1596, %v1694
      %v1699 = vadd.f32 %v1571, %v1695
      %v1700 = vadd.f32 %v1572, %v1696
      %v1701 = vadd.f32 %v1573, %v1697
      %v1702 = vadd.f32 %v1574, %v1698
      %v1703 = vtanh.pop %v1699
      %v1704 = vtanh.pop %v1700
      %v1705 = vtanh.pop %v1701
      %v1706 = vtanh.pop %v1702
      %v1707 = vmul.f32 %v1703, %v204
      %v1708 = vmul.f32 %v1704, %v209
      %v1709 = vmul.f32 %v1705, %v214
      %v1710 = vmul.f32 %v1706, %v219
      %v1711 = vadd.f32 %v1707, %v1708
      %v1712 = vadd.f32 %v1711, %v1709
      %v1713 = vadd.f32 %v1712, %v1710
      %v1714 = vrot.slane %v1713, 4
      %v1715 = vadd.f32 %v1713, %v1714
      %v1716 = vrot.slane %v1715, 2
      %v1717 = vadd.f32 %v1715, %v1716
      %v1718 = vrot.slane %v1717, 1
      %v1719 = vadd.f32 %v1717, %v1718
      %v1720 = vsub.f32 0.0, %v1719
      %v1721 = vmax.f32 %v1627, %v1658
      %v1722 = vmax.f32 %v1721, %v1689
      %v1723 = vmax.f32 %v1722, %v1720
      %v1724 = vsub.f32 %v1627, %v1723
      %v1725 = vmul.f32 %v1724, 1.442695
      %v1726 = vpow.pop %v1725
      %v1727 = vsub.f32 %v1658, %v1723
      %v1728 = vmul.f32 %v1727, 1.442695
      %v1729 = vpow.pop %v1728
      %v1730 = vsub.f32 %v1689, %v1723
      %v1731 = vmul.f32 %v1730, 1.442695
      %v1732 = vpow.pop %v1731
      %v1733 = vsub.f32 %v1720, %v1723
      %v1734 = vmul.f32 %v1733, 1.442695
      %v1735 = vpow.pop %v1734
      %v1736 = vadd.f32 %v1726, %v1729
      %v1737 = vadd.f32 %v1736, %v1732
      %v1738 = vadd.f32 %v1737, %v1735
      %v1739 = vmul.f32 %v167, %v1738
      %v1740 = vadd.f32 %v1726, 0.0
      %vm1741 = vcmp.ge.f32.partialorder %v1739, %v1740
      %v1742 = vsel %vm1741, 1, 0
      %v1743 = vcvt.s32.f32 %v1742
      %v1744 = vadd.f32 %v1743, 0.0
      %v1745 = vadd.f32 %v1740, %v1729
      %vm1746 = vcmp.ge.f32.partialorder %v1739, %v1745
      %v1747 = vsel %vm1746, 1, 0
      %v1748 = vcvt.s32.f32 %v1747
      %v1749 = vadd.f32 %v1744, %v1748
      %v1750 = vadd.f32 %v1745, %v1732
      %vm1751 = vcmp.ge.f32.partialorder %v1739, %v1750
      %v1752 = vsel %vm1751, 1, 0
      %v1753 = vcvt.s32.f32 %v1752
      %v1754 = vadd.f32 %v1749, %v1753
      %v1755 = vadd.f32 %v1750, %v1735
      %vm1756 = vcmp.ge.f32.partialorder %v1739, %v1755
      %v1757 = vsel %vm1756, 1, 0
      %v1758 = vcvt.s32.f32 %v1757
      %v1759 = vadd.f32 %v1754, %v1758
      %v1760 = vmin.f32 %v1759, 3.0
      %v1761 = vsub.f32 %v1760, %v1580
      %v1762 = vlaneseq
      %v1763 = vshrl.u32 %v1762, 7
      %v1764 = vsub.s32 7, %v1763
      %v1765 = vrot.slane %v1761, %v1764
      %v1766 = vmul.f32 %v1584, %v1765
      %v1767 = vmul.f32 %v1588, %v1765
      %v1768 = vmul.f32 %v1592, %v1765
      %v1769 = vmul.f32 %v1596, %v1765
      %v1770 = vadd.f32 %v1571, %v1766
      %v1771 = vadd.f32 %v1572, %v1767
      %v1772 = vadd.f32 %v1573, %v1768
      %v1773 = vadd.f32 %v1574, %v1769
      %vm1774 = vcmp.eq.s32.totalorder %v153, 7
      %v1775 = vlaneseq
      %v1776 = vshrl.u32 %v1775, 7
      %v1777 = vsub.s32 7, %v1776
      %v1778 = vrot.slane %v1760, %v1777
      %v1779 = vsel %vm1774, %v1778, %v1580
    $region26: #{tpu_custom_call.1} parent=1 // loop_footer
      %s159 = sadd.s32 1, %s155
    $region27: #{tpu_custom_call.1} parent=1 // loop_footer_branch
      %154 = sbr.rel target = $region23
    $region28: #{tpu_custom_call.1} parent=1 // loop_exit
      _
    %v1780 = vcvt.f32.s32.to.zero.pseudo %v160
    %1781 = vst [vmem:[#allocation2] sm:$0xff] %v1780
    // Predicated region
    $region29: #{tpu_custom_call.1} parent=1 // pred_check
      _
    $region30: #{tpu_custom_call.1} parent=1 // pred_check_branch
      %1783 = sbr.rel (0) target = $region32
    $region31: #{tpu_custom_call.1} parent=1 // pred_region
      %s1785 = ssub.s32 128, 128
      %1786 = vsyncadd [#allocation3], %s1785
      %s1788 = sshll.u32 [#allocation2], 4
      %s1789 = int_to_ptr.vmem [resolvable:$true] %s1788
      %1791 = dma.vmem_to_hbm [thread:$0]  %s1789, 128, %s5, [#allocation3]
    $region32: #{tpu_custom_call.1} parent=1 // pred_fallthru
      _
    // Predicated region
    $region33: #{tpu_custom_call.1} parent=1 // pred_check
      _
    $region34: #{tpu_custom_call.1} parent=1 // pred_check_branch
      %1793 = sbr.rel (0) target = $region36
    $region35: #{tpu_custom_call.1} parent=1 // pred_region
      %1794 = dma.done [#allocation3], 128
    $region36: #{tpu_custom_call.1} parent=1 // pred_fallthru
      _
    %1795 = vsyncpa [#allocation3], 1

</llo_original>
